<compile_context>
chip_gen: v7x
topology: tpu7x:2x2x1
jax: 0.10.0
libtpu: 0.0.40
codegen_flags: <defaults>
</compile_context>

<pallas_src>
import jax
import jax.numpy as jnp
from jax.experimental import pallas as pl
from jax.experimental.pallas import tpu as pltpu

Z_DIM = 8
N_HIDDEN = 1000   # logical hidden size (matches PyTorch N = 1000)
N_PAD = 1024      # padded hidden size: multiple of 128 lanes / 8 sublanes
TN = 256          # hidden-column tile for layers 2/3 (grid = N_PAD // TN)


def d_net_gauss_kernel(x_ref, w1_ref, b1_ref, w2_ref, b2_ref, w3_ref, b3_ref,
                       o_ref, h1_ref, acc_ref):
    j = pl.program_id(0)

    @pl.when(j == 0)
    def _():
        # Layer 1 (computed once, stays resident in VMEM scratch):
        #   h1 = relu(x @ W1 + b1)        (B, 8) @ (8, 1024) -> (B, 1024)
        h1 = jnp.dot(x_ref[...], w1_ref[...],
                     preferred_element_type=jnp.float32) + b1_ref[...]
        h1_ref[...] = jnp.maximum(h1, 0.0).astype(h1_ref.dtype)
        acc_ref[...] = jnp.zeros_like(acc_ref)

    # Layer 2, one tile of hidden columns (bf16 x bf16 -> f32 accumulate):
    #   h2_tile = relu(h1 @ W2[:, tile] + b2[tile])   (B, 1024) @ (1024, TN)
    h2 = jnp.dot(h1_ref[...], w2_ref[...],
                 preferred_element_type=jnp.float32) + b2_ref[...]
    h2 = jnp.maximum(h2, 0.0)

    # Layer 3 partial: logit += sum_lane(h2_tile * w3[tile])  (VPU + XLU;
    # keeps the single-output-column work off the MXU).
    acc_ref[...] += jnp.sum(h2 * w3_ref[...], axis=-1, keepdims=True)

    @pl.when(j == pl.num_programs(0) - 1)
    def _():
        o_ref[...] = jax.nn.sigmoid(acc_ref[...] + b3_ref[...]).astype(o_ref.dtype)


def d_net_gauss_forward(x, packed_params):
    """x: (B, Z_DIM) float32. Returns (B, 1) float32 sigmoid probabilities."""
    w1, b1, w2, b2, w3, b3 = packed_params
    B = x.shape[0]
    b_pad = ((B + 7) // 8) * 8
    if b_pad != B:
        x = jnp.pad(x, ((0, b_pad - B), (0, 0)))
    n_tiles = N_PAD // TN

    out = pl.pallas_call(
        d_net_gauss_kernel,
        out_shape=jax.ShapeDtypeStruct((b_pad, 1), jnp.float32),
        grid_spec=pltpu.PrefetchScalarGridSpec(
            num_scalar_prefetch=0,
            grid=(n_tiles,),
            in_specs=[
                pl.BlockSpec((b_pad, Z_DIM), lambda j: (0, 0)),   # x   (resident)
                pl.BlockSpec((Z_DIM, N_PAD), lambda j: (0, 0)),   # W1  (resident)
                pl.BlockSpec((1, N_PAD),     lambda j: (0, 0)),   # b1  (resident)
                pl.BlockSpec((N_PAD, TN),    lambda j: (0, j)),   # W2 column tile
                pl.BlockSpec((1, TN),        lambda j: (0, j)),   # b2 tile
                pl.BlockSpec((1, TN),        lambda j: (0, j)),   # w3 (row) tile
                pl.BlockSpec((1, 1),         lambda j: (0, 0)),   # b3
            ],
            out_specs=pl.BlockSpec((b_pad, 1), lambda j: (0, 0)),
            scratch_shapes=[
                pltpu.VMEM((b_pad, N_PAD), jnp.bfloat16),  # resident h1
                pltpu.VMEM((b_pad, 1), jnp.float32),       # logit accumulator
            ],
        ),
        compiler_params=pltpu.CompilerParams(
            # Single reduction-style axis (accumulator held across it).
            dimension_semantics=("arbitrary",),
            vmem_limit_bytes=32 << 20,
        ),
    )(x, w1, b1, w2, b2, w3, b3)
    return out[:B]


def init_params(key):
    """PyTorch nn.Linear default init: U(-1/sqrt(fan_in), 1/sqrt(fan_in))."""
    def linear(key, fan_in, fan_out):
        kw, kb = jax.random.split(key)
        bound = 1.0 / jnp.sqrt(float(fan_in))
        # stored as (in, out) so the kernel computes x @ W (== x @ W_pt.T)
        w = jax.random.uniform(kw, (fan_in, fan_out), jnp.float32,
                               minval=-bound, maxval=bound)
        b = jax.random.uniform(kb, (fan_out,), jnp.float32,
                               minval=-bound, maxval=bound)
        return w, b

    k1, k2, k3 = jax.random.split(key, 3)
    w1, b1 = linear(k1, Z_DIM, N_HIDDEN)
    w2, b2 = linear(k2, N_HIDDEN, N_HIDDEN)
    w3, b3 = linear(k3, N_HIDDEN, 1)
    return (w1, b1, w2, b2, w3, b3)


def pack_params(params):
    """Zero-pad hidden dim 1000 -> 1024 and cast the big W2 to bfloat16.

    Zero padding keeps the logits identical to the unpadded network: padded
    h1 units are exactly 0 (zero W1 cols, zero b1 pad), padded W2 rows/cols
    are zero, padded b2 entries are zero, and padded w3 entries are zero so
    nothing can leak into the logit.
    """
    w1, b1, w2, b2, w3, b3 = params
    pad = N_PAD - N_HIDDEN
    w1p = jnp.pad(w1, ((0, 0), (0, pad)))                          # (8, 1024)   f32
    b1p = jnp.pad(b1, ((0, pad),)).reshape(1, N_PAD)               # (1, 1024)   f32
    w2p = jnp.pad(w2, ((0, pad), (0, pad))).astype(jnp.bfloat16)   # (1024,1024) bf16
    b2p = jnp.pad(b2, ((0, pad),)).reshape(1, N_PAD)               # (1, 1024)   f32
    w3p = jnp.pad(w3[:, 0], ((0, pad),)).reshape(1, N_PAD)         # (1, 1024)   f32
    b3p = b3.reshape(1, 1)                                         # (1, 1)      f32
    return (w1p, b1p, w2p, b2p, w3p, b3p)


def reference_forward(x, params):
    """Pure-JAX f32 reference (eval-mode dropout == identity)."""
    w1, b1, w2, b2, w3, b3 = params
    h1 = jnp.maximum(x @ w1 + b1, 0.0)
    h2 = jnp.maximum(h1 @ w2 + b2, 0.0)
    return jax.nn.sigmoid(h2 @ w3 + b3)


if __name__ == "__main__":
    key = jax.random.PRNGKey(0)
    k_params, k_x = jax.random.split(key)

    params = init_params(k_params)
    packed = pack_params(params)

    batch = 8  # small batch; a larger batch amortizes the weight DMA further
    x = jax.random.normal(k_x, (batch, Z_DIM), dtype=jnp.float32)

    out = d_net_gauss_forward(x, packed)
    out = jax.block_until_ready(out)

    # Sanity: shape, sigmoid range, and agreement with the f32 reference
    # (tolerance covers the bf16 W2 cast).
    assert out.shape == (batch, 1)
    assert bool(jnp.all((out >= 0.0) & (out <= 1.0)))
    ref = reference_forward(x, params)
    assert bool(jnp.max(jnp.abs(out - ref)) < 5e-2)

    print("KERNEL_OK")
</pallas_src>

<mosaic_0001>
module attributes {stable_mosaic.version = 11 : i64} {
  func.func @d_net_gauss_kernel(%arg0: i32, %arg1: memref<8x8xf32, #tpu.memory_space<vmem>>, %arg2: memref<8x1024xf32, #tpu.memory_space<vmem>>, %arg3: memref<1x1024xf32, #tpu.memory_space<vmem>>, %arg4: memref<1024x256xbf16, #tpu.memory_space<vmem>>, %arg5: memref<1x256xf32, #tpu.memory_space<vmem>>, %arg6: memref<1x256xf32, #tpu.memory_space<vmem>>, %arg7: memref<1x1xf32, #tpu.memory_space<vmem>>, %arg8: memref<8x1xf32, #tpu.memory_space<vmem>>, %arg9: memref<8x1024xbf16, #tpu.memory_space<vmem>>, %arg10: memref<8x1xf32, #tpu.memory_space<vmem>>) attributes {dimension_semantics = [#tpu.dimension_semantics<arbitrary>], iteration_bounds = array<i64: 4>, scalar_prefetch = 0 : i64, scratch_operands = 2 : i64, tpu.core_type = #tpu.core_type<tc>, window_params = [{pipeline_mode = #tpu.pipeline_mode<synchronous>, transform_indices = @transform_0, window_bounds = array<i64: 8, 8>}, {pipeline_mode = #tpu.pipeline_mode<synchronous>, transform_indices = @transform_1, window_bounds = array<i64: 8, 1024>}, {pipeline_mode = #tpu.pipeline_mode<synchronous>, transform_indices = @transform_2, window_bounds = array<i64: 1, 1024>}, {transform_indices = @transform_3, window_bounds = array<i64: 1024, 256>}, {transform_indices = @transform_4, window_bounds = array<i64: 1, 256>}, {transform_indices = @transform_5, window_bounds = array<i64: 1, 256>}, {pipeline_mode = #tpu.pipeline_mode<synchronous>, transform_indices = @transform_6, window_bounds = array<i64: 1, 1>}, {pipeline_mode = #tpu.pipeline_mode<synchronous>, transform_indices = @transform_7, window_bounds = array<i64: 8, 1>}]} {
    %c0_i32 = arith.constant 0 : i32
    %0 = arith.cmpi eq, %arg0, %c0_i32 : i32
    %1 = arith.extui %0 : i1 to i32
    %c0_i32_0 = arith.constant 0 : i32
    %2 = arith.cmpi ne, %1, %c0_i32_0 : i32
    scf.if %2 {
      %c0_15 = arith.constant 0 : index
      %c0_16 = arith.constant 0 : index
      %22 = vector.load %arg1[%c0_15, %c0_16] : memref<8x8xf32, #tpu.memory_space<vmem>>, vector<8x8xf32>
      %c0_17 = arith.constant 0 : index
      %c0_18 = arith.constant 0 : index
      %23 = vector.load %arg2[%c0_17, %c0_18] : memref<8x1024xf32, #tpu.memory_space<vmem>>, vector<8x1024xf32>
      %cst_19 = arith.constant dense<0.000000e+00> : vector<8x1024xf32>
      %24 = tpu.matmul %22, %23, %cst_19 {dimension_numbers = #tpu.dot_dimension_numbers<[1], [0], [0], [1], [0, 0, 1, 1], [], []>} : vector<8x8xf32>, vector<8x1024xf32>, vector<8x1024xf32> -> vector<8x1024xf32>
      %c0_20 = arith.constant 0 : index
      %c0_21 = arith.constant 0 : index
      %25 = vector.load %arg3[%c0_20, %c0_21] : memref<1x1024xf32, #tpu.memory_space<vmem>>, vector<1x1024xf32>
      %26 = vector.broadcast %25 : vector<1x1024xf32> to vector<8x1024xf32>
      %27 = arith.addf %24, %26 : vector<8x1024xf32>
      %cst_22 = arith.constant 0.000000e+00 : f32
      %28 = vector.broadcast %cst_22 : f32 to vector<8x1024xf32>
      %29 = arith.maximumf %27, %28 : vector<8x1024xf32>
      %30 = arith.truncf %29 : vector<8x1024xf32> to vector<8x1024xbf16>
      %c0_23 = arith.constant 0 : index
      %c0_24 = arith.constant 0 : index
      %31 = vector.load %arg9[%c0_23, %c0_24] : memref<8x1024xbf16, #tpu.memory_space<vmem>>, vector<8x1024xbf16>
      tpu.vector_store %arg9[%c0_23, %c0_24], %30 {strides = array<i32>} : memref<8x1024xbf16, #tpu.memory_space<vmem>>, vector<8x1024xbf16>,
      %cst_25 = arith.constant 0.000000e+00 : f32
      %32 = vector.broadcast %cst_25 : f32 to vector<8x1xf32>
      %c0_26 = arith.constant 0 : index
      %c0_27 = arith.constant 0 : index
      %33 = vector.load %arg10[%c0_26, %c0_27] : memref<8x1xf32, #tpu.memory_space<vmem>>, vector<8x1xf32>
      tpu.vector_store %arg10[%c0_26, %c0_27], %32 {strides = array<i32>} : memref<8x1xf32, #tpu.memory_space<vmem>>, vector<8x1xf32>,
    } else {
    }
    %c0 = arith.constant 0 : index
    %c0_1 = arith.constant 0 : index
    %3 = vector.load %arg9[%c0, %c0_1] : memref<8x1024xbf16, #tpu.memory_space<vmem>>, vector<8x1024xbf16>
    %c0_2 = arith.constant 0 : index
    %c0_3 = arith.constant 0 : index
    %4 = vector.load %arg4[%c0_2, %c0_3] : memref<1024x256xbf16, #tpu.memory_space<vmem>>, vector<1024x256xbf16>
    %cst = arith.constant dense<0.000000e+00> : vector<8x256xf32>
    %5 = tpu.matmul %3, %4, %cst {dimension_numbers = #tpu.dot_dimension_numbers<[1], [0], [0], [1], [0, 0, 1, 1], [], []>} : vector<8x1024xbf16>, vector<1024x256xbf16>, vector<8x256xf32> -> vector<8x256xf32>
    %c0_4 = arith.constant 0 : index
    %c0_5 = arith.constant 0 : index
    %6 = vector.load %arg5[%c0_4, %c0_5] : memref<1x256xf32, #tpu.memory_space<vmem>>, vector<1x256xf32>
    %7 = vector.broadcast %6 : vector<1x256xf32> to vector<8x256xf32>
    %8 = arith.addf %5, %7 : vector<8x256xf32>
    %cst_6 = arith.constant 0.000000e+00 : f32
    %9 = vector.broadcast %cst_6 : f32 to vector<8x256xf32>
    %10 = arith.maximumf %8, %9 : vector<8x256xf32>
    %c0_7 = arith.constant 0 : index
    %c0_8 = arith.constant 0 : index
    %11 = vector.load %arg10[%c0_7, %c0_8] : memref<8x1xf32, #tpu.memory_space<vmem>>, vector<8x1xf32>
    %c0_9 = arith.constant 0 : index
    %c0_10 = arith.constant 0 : index
    %12 = vector.load %arg6[%c0_9, %c0_10] : memref<1x256xf32, #tpu.memory_space<vmem>>, vector<1x256xf32>
    %13 = vector.broadcast %12 : vector<1x256xf32> to vector<8x256xf32>
    %14 = arith.mulf %10, %13 : vector<8x256xf32>
    %cst_11 = arith.constant dense<0.000000e+00> : vector<8xf32>
    %15 = vector.multi_reduction <add>, %14, %cst_11 [1] : vector<8x256xf32> to vector<8xf32>
    %16 = vector.shape_cast %15 : vector<8xf32> to vector<8x1xf32>
    %17 = arith.addf %11, %16 : vector<8x1xf32>
    %c0_12 = arith.constant 0 : index
    %c0_13 = arith.constant 0 : index
    %18 = vector.load %arg10[%c0_12, %c0_13] : memref<8x1xf32, #tpu.memory_space<vmem>>, vector<8x1xf32>
    tpu.vector_store %arg10[%c0_12, %c0_13], %17 {strides = array<i32>} : memref<8x1xf32, #tpu.memory_space<vmem>>, vector<8x1xf32>,
    %c3_i32 = arith.constant 3 : i32
    %19 = arith.cmpi eq, %arg0, %c3_i32 : i32
    %20 = arith.extui %19 : i1 to i32
    %c0_i32_14 = arith.constant 0 : i32
    %21 = arith.cmpi ne, %20, %c0_i32_14 : i32
    scf.if %21 {
      %c0_15 = arith.constant 0 : index
      %c0_16 = arith.constant 0 : index
      %22 = vector.load %arg10[%c0_15, %c0_16] : memref<8x1xf32, #tpu.memory_space<vmem>>, vector<8x1xf32>
      %c0_17 = arith.constant 0 : index
      %c0_18 = arith.constant 0 : index
      %23 = vector.load %arg7[%c0_17, %c0_18] : memref<1x1xf32, #tpu.memory_space<vmem>>, vector<1x1xf32>
      %24 = vector.broadcast %23 : vector<1x1xf32> to vector<8x1xf32>
      %25 = arith.addf %22, %24 : vector<8x1xf32>
      %26 = arith.negf %25 : vector<8x1xf32>
      %27 = math.exp %26 : vector<8x1xf32>
      %cst_19 = arith.constant 1.000000e+00 : f32
      %28 = vector.broadcast %cst_19 : f32 to vector<8x1xf32>
      %29 = arith.addf %28, %27 : vector<8x1xf32>
      %30 = arith.divf %28, %29 : vector<8x1xf32>
      %c0_20 = arith.constant 0 : index
      %c0_21 = arith.constant 0 : index
      %31 = vector.load %arg8[%c0_20, %c0_21] : memref<8x1xf32, #tpu.memory_space<vmem>>, vector<8x1xf32>
      tpu.vector_store %arg8[%c0_20, %c0_21], %30 {strides = array<i32>} : memref<8x1xf32, #tpu.memory_space<vmem>>, vector<8x1xf32>,
    } else {
    }
    return
  }
  func.func @transform_0(%arg0: i32) -> (i32, i32) {
    %c0_i32 = arith.constant 0 : i32
    %c0_i32_0 = arith.constant 0 : i32
    %c0_i32_1 = arith.constant 0 : i32
    return %c0_i32, %c0_i32_0 : i32, i32
  }
  func.func @transform_1(%arg0: i32) -> (i32, i32) {
    %c0_i32 = arith.constant 0 : i32
    %c0_i32_0 = arith.constant 0 : i32
    %c0_i32_1 = arith.constant 0 : i32
    return %c0_i32, %c0_i32_0 : i32, i32
  }
  func.func @transform_2(%arg0: i32) -> (i32, i32) {
    %c0_i32 = arith.constant 0 : i32
    %c0_i32_0 = arith.constant 0 : i32
    %c0_i32_1 = arith.constant 0 : i32
    return %c0_i32, %c0_i32_0 : i32, i32
  }
  func.func @transform_3(%arg0: i32) -> (i32, i32) {
    %c0_i32 = arith.constant 0 : i32
    %c0_i32_0 = arith.constant 0 : i32
    return %c0_i32, %arg0 : i32, i32
  }
  func.func @transform_4(%arg0: i32) -> (i32, i32) {
    %c0_i32 = arith.constant 0 : i32
    %c0_i32_0 = arith.constant 0 : i32
    return %c0_i32, %arg0 : i32, i32
  }
  func.func @transform_5(%arg0: i32) -> (i32, i32) {
    %c0_i32 = arith.constant 0 : i32
    %c0_i32_0 = arith.constant 0 : i32
    return %c0_i32, %arg0 : i32, i32
  }
  func.func @transform_6(%arg0: i32) -> (i32, i32) {
    %c0_i32 = arith.constant 0 : i32
    %c0_i32_0 = arith.constant 0 : i32
    %c0_i32_1 = arith.constant 0 : i32
    return %c0_i32, %c0_i32_0 : i32, i32
  }
  func.func @transform_7(%arg0: i32) -> (i32, i32) {
    %c0_i32 = arith.constant 0 : i32
    %c0_i32_0 = arith.constant 0 : i32
    %c0_i32_1 = arith.constant 0 : i32
    return %c0_i32, %c0_i32_0 : i32, i32
  }
}

</mosaic_0001>

<llo_original>
// kernel: tpu_custom_call.1
$region0: #{tpu_custom_call.1}
  #allocation0 [shape = 'u32[]', space=smem, size = 0x4, offset = 0x4, fixed_abs, tag = 'smem constant byte address 0x4 - core index']
  #allocation1 [shape = 'u32[144,128]{1,0:T(1,128)}', space=vmem, size = 0x12000, scoped, tag = 'internal scratch']
  #allocation2 [shape = 'bf16[8,1024]{1,0:T(8,128)(2,1)}', space=vmem, size = 0x4000, scoped, tag = 'scratch operand']
  #allocation3 [shape = 'f32[8,1]{1,0:T(8,128)}', space=vmem, size = 0x1000, scoped, tag = 'scratch operand']
  #allocation4 [shape = 'f32[1,1]{1,0:T(1,128)S(1)}', space=vmem, size = 0x200, scoped, tag = 'scoped memory for tpu_custom_call.1']
  %s0 = inlined_call_operand.hbm [shape: f32[8,8], index: 0, kind: input, shape index: {}]
  %s1 = inlined_call_operand.hbm [shape: f32[8,1024], index: 1, kind: input, shape index: {}]
  %s2 = inlined_call_operand.hbm [shape: f32[1,1024], index: 2, kind: input, shape index: {}]
  %s3 = inlined_call_operand.hbm [shape: bf16[1024,1024], index: 3, kind: input, shape index: {}]
  %s4 = inlined_call_operand.hbm [shape: f32[1,1024], index: 4, kind: input, shape index: {}]
  %s5 = inlined_call_operand.hbm [shape: f32[1,1024], index: 5, kind: input, shape index: {}]
  %s6 = inlined_call_operand.<no memory space> [shape: f32[1,1], index: 6, kind: input, shape index: {}]
  %s7 = inlined_call_operand.vmem [shape: f32[8,1], index: 7, kind: output, shape index: {}]
  %s8 = sld [smem:[#allocation0]]
  $region93: #{tpu_custom_call.1} parent=0
    _
  %s10 = ssub.s32 1, %s8
  %s11 = scalar_select 0, %s10, %s8
  %v12 = vstv %s6
  %13 = vst [vmem:[#allocation4] sm:$0x1] %v12
  $region1: #{tpu_custom_call.1} parent=0
    #allocation5 [shape = 'u8[4096]{0}', space=vmem, size = 0x1000, scoped, tag = 'input window, operand 0, single buffered']
    #allocation6 [shape = 's32[2]{0}', space=sflag, size = 0x8, scoped, tag = 'scoped memory for tpu_custom_call.1']
    #allocation7 [shape = 'u8[32768]{0}', space=vmem, size = 0x8000, scoped, tag = 'input window, operand 1, single buffered']
    #allocation8 [shape = 's32[1]{0}', space=sflag, size = 0x4, scoped, tag = 'scoped memory for tpu_custom_call.1']
    #allocation9 [shape = 'u8[4096]{0}', space=vmem, size = 0x1000, scoped, tag = 'input window, operand 2, single buffered']
    #allocation10 [shape = 'u8[1048576]{0}', space=vmem, size = 0x100000, scoped, tag = 'input window, operand 3']
    #allocation11 [shape = 's32[2]{0}', space=sflag, size = 0x8, scoped, tag = 'scoped memory for tpu_custom_call.1']
    #allocation12 [shape = 'u8[2048]{0}', space=vmem, size = 0x800, scoped, tag = 'input window, operand 4']
    #allocation13 [shape = 'u8[2048]{0}', space=vmem, size = 0x800, scoped, tag = 'input window, operand 5']
    #allocation14 [shape = 's32[2]{0}', space=sflag, size = 0x8, scoped, tag = 'scoped memory for tpu_custom_call.1']
    %14 = vsyncpa [#allocation6], 0
    %15 = vsyncpa [#allocation8], 0
    %16 = vsyncpa [#allocation11], 0
    %s17 = scalar_lea.sflag [#allocation11], 1
    %18 = vsyncpa %s17, 0
    %19 = vsyncpa [#allocation14], 0
    %s20 = scalar_lea.sflag [#allocation14], 1
    %21 = vsyncpa %s20, 0
    loop: start=0, step=1, limit=6
    $region2: #{tpu_custom_call.1} parent=1 // loop_pre_header
      _
    $region3: #{tpu_custom_call.1} parent=1 // loop_header
      %s23 = sphi 0, %s27
      %p24 = scmp.ge.s32.totalorder %s23, 6
      %s31 = sphi 0, %s31
      %s33 = sphi 0, %s31
      %s34 = sphi 0, %s33
      %s48 = sphi 0, %s34
      %s52 = sphi 0, %s52
      %s54 = sphi 0, %s52
      %s55 = sphi 0, %s54
      %s69 = sphi 0, %s55
      %s73 = sphi 0, %s73
      %s75 = sphi 0, %s73
      %s76 = sphi 0, %s75
      %s90 = sphi 0, %s76
      %s96 = sphi 0, %s98
      %s99 = sphi 0, %s96
      %s100 = sphi 0, %s99
      %s116 = sphi 0, %s100
      %s122 = sphi 0, %s124
      %s125 = sphi 0, %s122
      %s126 = sphi 0, %s125
      %s142 = sphi 0, %s126
      %s148 = sphi 0, %s150
      %s151 = sphi 0, %s148
      %s152 = sphi 0, %s151
      %s168 = sphi 0, %s152
      %s172 = sphi 0, %s172
      %s174 = sphi 0, %s172
      %s175 = sphi 0, %s174
      %s189 = sphi 0, %s175
      %s193 = sphi 0, %s193
      %s195 = sphi 0, %s193
      %s196 = sphi 0, %s195
      %s210 = sphi 0, %s196
    $region4: #{tpu_custom_call.1} parent=1 // loop_header_branch
      %26 = sbr.rel (%p24) target = $region8
    $region5: #{tpu_custom_call.1} parent=1 // loop_body
      %s28 = ssub.s32 %s23, 1
      %s29 = ssub.s32 %s23, 2
      %s30 = sadd.s32 %s23, 1
      %s32 = sadd.s32 %s31, 1
      %p35 = scmp.eq.s32.totalorder %s23, 3
      %p36 = scmp.ne.s32.totalorder %s31, %s33
      %p37 = scmp.eq.s32.totalorder %s23, 0
      %p38 = por %p36, %p37
      %p39 = scmp.ne.s32.totalorder %s31, %s33
      %p40 = scmp.eq.s32.totalorder %s28, 3
      %p41 = por %p39, %p40
      %p42 = scmp.ne.s32.totalorder %s33, %s34
      %p43 = scmp.eq.s32.totalorder %s28, 0
      %p44 = por %p42, %p43
      %p45 = scmp.ne.s32.totalorder %s33, %s34
      %p46 = scmp.eq.s32.totalorder %s29, 3
      %p47 = por %p45, %p46
      %p49 = scmp.ne.s32.totalorder %s34, %s48
      %p50 = scmp.eq.s32.totalorder %s29, 0
      %p51 = por %p49, %p50
      %s53 = sadd.s32 %s52, 1
      %p56 = scmp.eq.s32.totalorder %s23, 3
      %p57 = scmp.ne.s32.totalorder %s52, %s54
      %p58 = scmp.eq.s32.totalorder %s23, 0
      %p59 = por %p57, %p58
      %p60 = scmp.ne.s32.totalorder %s52, %s54
      %p61 = scmp.eq.s32.totalorder %s28, 3
      %p62 = por %p60, %p61
      %p63 = scmp.ne.s32.totalorder %s54, %s55
      %p64 = scmp.eq.s32.totalorder %s28, 0
      %p65 = por %p63, %p64
      %p66 = scmp.ne.s32.totalorder %s54, %s55
      %p67 = scmp.eq.s32.totalorder %s29, 3
      %p68 = por %p66, %p67
      %p70 = scmp.ne.s32.totalorder %s55, %s69
      %p71 = scmp.eq.s32.totalorder %s29, 0
      %p72 = por %p70, %p71
      %s74 = sadd.s32 %s73, 1
      %p77 = scmp.eq.s32.totalorder %s23, 3
      %p78 = scmp.ne.s32.totalorder %s73, %s75
      %p79 = scmp.eq.s32.totalorder %s23, 0
      %p80 = por %p78, %p79
      %p81 = scmp.ne.s32.totalorder %s73, %s75
      %p82 = scmp.eq.s32.totalorder %s28, 3
      %p83 = por %p81, %p82
      %p84 = scmp.ne.s32.totalorder %s75, %s76
      %p85 = scmp.eq.s32.totalorder %s28, 0
      %p86 = por %p84, %p85
      %p87 = scmp.ne.s32.totalorder %s75, %s76
      %p88 = scmp.eq.s32.totalorder %s29, 3
      %p89 = por %p87, %p88
      %p91 = scmp.ne.s32.totalorder %s76, %s90
      %p92 = scmp.eq.s32.totalorder %s29, 0
      %p93 = por %p91, %p92
      %s94 = ssub.s32 %s23, %s30
      %p95 = scmp.eq.s32.totalorder %s94, 0
      %s97 = sadd.s32 %s96, 1
      %s98 = scalar_select %p95, %s96, %s97
      %p101 = pneg %p95
      %p102 = scmp.eq.s32.totalorder %s23, 3
      %p103 = por %p101, %p102
      %p104 = scmp.ne.s32.totalorder %s96, %s99
      %p105 = scmp.eq.s32.totalorder %s23, 0
      %p106 = por %p104, %p105
      %p107 = scmp.ne.s32.totalorder %s96, %s99
      %p108 = scmp.eq.s32.totalorder %s28, 3
      %p109 = por %p107, %p108
      %p110 = scmp.ne.s32.totalorder %s99, %s100
      %p111 = scmp.eq.s32.totalorder %s28, 0
      %p112 = por %p110, %p111
      %p113 = scmp.ne.s32.totalorder %s99, %s100
      %p114 = scmp.eq.s32.totalorder %s29, 3
      %p115 = por %p113, %p114
      %p117 = scmp.ne.s32.totalorder %s100, %s116
      %p118 = scmp.eq.s32.totalorder %s29, 0
      %p119 = por %p117, %p118
      %s120 = ssub.s32 %s23, %s30
      %p121 = scmp.eq.s32.totalorder %s120, 0
      %s123 = sadd.s32 %s122, 1
      %s124 = scalar_select %p121, %s122, %s123
      %p127 = pneg %p121
      %p128 = scmp.eq.s32.totalorder %s23, 3
      %p129 = por %p127, %p128
      %p130 = scmp.ne.s32.totalorder %s122, %s125
      %p131 = scmp.eq.s32.totalorder %s23, 0
      %p132 = por %p130, %p131
      %p133 = scmp.ne.s32.totalorder %s122, %s125
      %p134 = scmp.eq.s32.totalorder %s28, 3
      %p135 = por %p133, %p134
      %p136 = scmp.ne.s32.totalorder %s125, %s126
      %p137 = scmp.eq.s32.totalorder %s28, 0
      %p138 = por %p136, %p137
      %p139 = scmp.ne.s32.totalorder %s125, %s126
      %p140 = scmp.eq.s32.totalorder %s29, 3
      %p141 = por %p139, %p140
      %p143 = scmp.ne.s32.totalorder %s126, %s142
      %p144 = scmp.eq.s32.totalorder %s29, 0
      %p145 = por %p143, %p144
      %s146 = ssub.s32 %s23, %s30
      %p147 = scmp.eq.s32.totalorder %s146, 0
      %s149 = sadd.s32 %s148, 1
      %s150 = scalar_select %p147, %s148, %s149
      %p153 = pneg %p147
      %p154 = scmp.eq.s32.totalorder %s23, 3
      %p155 = por %p153, %p154
      %p156 = scmp.ne.s32.totalorder %s148, %s151
      %p157 = scmp.eq.s32.totalorder %s23, 0
      %p158 = por %p156, %p157
      %p159 = scmp.ne.s32.totalorder %s148, %s151
      %p160 = scmp.eq.s32.totalorder %s28, 3
      %p161 = por %p159, %p160
      %p162 = scmp.ne.s32.totalorder %s151, %s152
      %p163 = scmp.eq.s32.totalorder %s28, 0
      %p164 = por %p162, %p163
      %p165 = scmp.ne.s32.totalorder %s151, %s152
      %p166 = scmp.eq.s32.totalorder %s29, 3
      %p167 = por %p165, %p166
      %p169 = scmp.ne.s32.totalorder %s152, %s168
      %p170 = scmp.eq.s32.totalorder %s29, 0
      %p171 = por %p169, %p170
      %s173 = sadd.s32 %s172, 1
      %p176 = scmp.eq.s32.totalorder %s23, 3
      %p177 = scmp.ne.s32.totalorder %s172, %s174
      %p178 = scmp.eq.s32.totalorder %s23, 0
      %p179 = por %p177, %p178
      %p180 = scmp.ne.s32.totalorder %s172, %s174
      %p181 = scmp.eq.s32.totalorder %s28, 3
      %p182 = por %p180, %p181
      %p183 = scmp.ne.s32.totalorder %s174, %s175
      %p184 = scmp.eq.s32.totalorder %s28, 0
      %p185 = por %p183, %p184
      %p186 = scmp.ne.s32.totalorder %s174, %s175
      %p187 = scmp.eq.s32.totalorder %s29, 3
      %p188 = por %p186, %p187
      %p190 = scmp.ne.s32.totalorder %s175, %s189
      %p191 = scmp.eq.s32.totalorder %s29, 0
      %p192 = por %p190, %p191
      %s194 = sadd.s32 %s193, 1
      %p197 = scmp.eq.s32.totalorder %s23, 3
      %p198 = scmp.ne.s32.totalorder %s193, %s195
      %p199 = scmp.eq.s32.totalorder %s23, 0
      %p200 = por %p198, %p199
      %p201 = scmp.ne.s32.totalorder %s193, %s195
      %p202 = scmp.eq.s32.totalorder %s28, 3
      %p203 = por %p201, %p202
      %p204 = scmp.ne.s32.totalorder %s195, %s196
      %p205 = scmp.eq.s32.totalorder %s28, 0
      %p206 = por %p204, %p205
      %p207 = scmp.ne.s32.totalorder %s195, %s196
      %p208 = scmp.eq.s32.totalorder %s29, 3
      %p209 = por %p207, %p208
      %p211 = scmp.ne.s32.totalorder %s196, %s210
      %p212 = scmp.eq.s32.totalorder %s29, 0
      %p213 = por %p211, %p212
      %p214 = scmp.le.s32.totalorder 1, %s23
      %p215 = scmp.lt.s32.totalorder %s23, 5
      %p216 = pnand %p214, %p215
      %p217 = pneg %p216
      // Predicated region
      $region9: #{tpu_custom_call.1} parent=5 // pred_check
        _
      $region10: #{tpu_custom_call.1} parent=5 // pred_check_branch
        %219 = sbr.rel (%p216) target = $region12
      $region11: #{tpu_custom_call.1} parent=5 // pred_region
        %s220 = ssub.s32 %s23, 1
        // Predicated region
        $region13: #{tpu_custom_call.1} parent=11 // pred_check
          %p221 = pneg %p44
        $region14: #{tpu_custom_call.1} parent=11 // pred_check_branch
          %223 = sbr.rel (%p221) target = $region16
        $region15: #{tpu_custom_call.1} parent=11 // pred_region
          %s225 = ssub.s32 128, 128
          %226 = vsyncadd [#allocation6], %s225
          %s228 = sshll.u32 [#allocation5], 4
          %s229 = int_to_ptr.vmem [resolvable:$true] %s228
          %231 = dma.hbm_to_vmem [thread:$0]  %s0, 128, %s229, [#allocation6]
        $region16: #{tpu_custom_call.1} parent=11 // pred_fallthru
          _
        // Predicated region
        $region17: #{tpu_custom_call.1} parent=11 // pred_check
          %p232 = pneg %p65
        $region18: #{tpu_custom_call.1} parent=11 // pred_check_branch
          %234 = sbr.rel (%p232) target = $region20
        $region19: #{tpu_custom_call.1} parent=11 // pred_region
          %s236 = ssub.s32 1024, 1024
          %237 = vsyncadd [#allocation8], %s236
          %s239 = sshll.u32 [#allocation7], 4
          %s240 = int_to_ptr.vmem [resolvable:$true] %s239
          %242 = dma.hbm_to_vmem [thread:$0]  %s1, 1024, %s240, [#allocation8]
        $region20: #{tpu_custom_call.1} parent=11 // pred_fallthru
          _
        // Predicated region
        $region21: #{tpu_custom_call.1} parent=11 // pred_check
          %p243 = pneg %p86
        $region22: #{tpu_custom_call.1} parent=11 // pred_check_branch
          %245 = sbr.rel (%p243) target = $region24
        $region23: #{tpu_custom_call.1} parent=11 // pred_region
          %s247 = ssub.s32 128, 128
          %248 = vsyncadd [#allocation8], %s247
          %s250 = sshll.u32 [#allocation9], 4
          %s251 = int_to_ptr.vmem [resolvable:$true] %s250
          %253 = dma.hbm_to_vmem [thread:$0]  %s2, 128, %s251, [#allocation8]
        $region24: #{tpu_custom_call.1} parent=11 // pred_fallthru
          _
        // Predicated region
        $region25: #{tpu_custom_call.1} parent=11 // pred_check
          %p254 = pneg %p185
        $region26: #{tpu_custom_call.1} parent=11 // pred_check_branch
          %256 = sbr.rel (%p254) target = $region28
        $region27: #{tpu_custom_call.1} parent=11 // pred_region
          _
        $region28: #{tpu_custom_call.1} parent=11 // pred_fallthru
          _
      $region12: #{tpu_custom_call.1} parent=5 // pred_fallthru
        _
      %p257 = scmp.lt.s32.totalorder %s23, 4
      // Predicated region
      $region29: #{tpu_custom_call.1} parent=5 // pred_check
        %p258 = pneg %p257
      $region30: #{tpu_custom_call.1} parent=5 // pred_check_branch
        %260 = sbr.rel (%p258) target = $region32
      $region31: #{tpu_custom_call.1} parent=5 // pred_region
        // Predicated region
        $region33: #{tpu_custom_call.1} parent=31 // pred_check
          %p261 = pneg %p106
        $region34: #{tpu_custom_call.1} parent=31 // pred_check_branch
          %263 = sbr.rel (%p261) target = $region36
        $region35: #{tpu_custom_call.1} parent=31 // pred_region
          %s264 = sand.u32 %s23, 1
          %s265 = scalar_lea.sflag [#allocation11], %s264
          %s266 = sand.u32 %s96, 1
          %s267 = smul.addr %s266, 1024
          %s268 = scalar_lea.vmem [#allocation10], %s267
          %s269 = smul.u32 2, %s23
          %s271 = ssub.s32 16384, 16384
          %272 = vsyncadd %s265, %s271
          %s273 = smul.addr %s269, 64
          %s274 = scalar_lea.hbm %s3, %s273
          %s275 = sshll.u32 %s268, 4
          %s276 = int_to_ptr.vmem [resolvable:$true] %s275
          %281 = dma.hbm_to_vmem [thread:$0]  %s274, 16384, %s276, %s265, 512, 128, 8
        $region36: #{tpu_custom_call.1} parent=31 // pred_fallthru
          _
        // Predicated region
        $region37: #{tpu_custom_call.1} parent=31 // pred_check
          %p282 = pneg %p132
        $region38: #{tpu_custom_call.1} parent=31 // pred_check_branch
          %284 = sbr.rel (%p282) target = $region40
        $region39: #{tpu_custom_call.1} parent=31 // pred_region
          %s285 = sand.u32 %s23, 1
          %s286 = scalar_lea.sflag [#allocation11], %s285
          %s287 = sand.u32 %s122, 1
          %s288 = smul.addr %s287, 2
          %s289 = scalar_lea.vmem [#allocation12], %s288
          %s290 = smul.u32 2, %s23
          %s292 = ssub.s32 32, 32
          %293 = vsyncadd %s286, %s292
          %s294 = smul.addr %s290, 16
          %s295 = scalar_lea.hbm %s4, %s294
          %s297 = sshll.u32 %s289, 4
          %s298 = int_to_ptr.vmem [resolvable:$true] %s297
          %300 = dma.hbm_to_vmem [thread:$0]  %s295, 32, %s298, %s286
        $region40: #{tpu_custom_call.1} parent=31 // pred_fallthru
          _
        // Predicated region
        $region41: #{tpu_custom_call.1} parent=31 // pred_check
          %p301 = pneg %p158
        $region42: #{tpu_custom_call.1} parent=31 // pred_check_branch
          %303 = sbr.rel (%p301) target = $region44
        $region43: #{tpu_custom_call.1} parent=31 // pred_region
          %s304 = sand.u32 %s148, 1
          %s305 = scalar_lea.sflag [#allocation14], %s304
          %s306 = sand.u32 %s148, 1
          %s307 = smul.addr %s306, 2
          %s308 = scalar_lea.vmem [#allocation13], %s307
          %s309 = smul.u32 2, %s23
          %s311 = ssub.s32 32, 32
          %312 = vsyncadd %s305, %s311
          %s313 = smul.addr %s309, 16
          %s314 = scalar_lea.hbm %s5, %s313
          %s316 = sshll.u32 %s308, 4
          %s317 = int_to_ptr.vmem [resolvable:$true] %s316
          %319 = dma.hbm_to_vmem [thread:$0]  %s314, 32, %s317, %s305
        $region44: #{tpu_custom_call.1} parent=31 // pred_fallthru
          _
      $region32: #{tpu_custom_call.1} parent=5 // pred_fallthru
        _
      %p320 = scmp.le.s32.totalorder 1, %s23
      %p321 = scmp.lt.s32.totalorder %s23, 5
      %p322 = pnand %p320, %p321
      %p323 = pneg %p322
      // Predicated region
      $region45: #{tpu_custom_call.1} parent=5 // pred_check
        _
      $region46: #{tpu_custom_call.1} parent=5 // pred_check_branch
        %325 = sbr.rel (%p322) target = $region48
      $region47: #{tpu_custom_call.1} parent=5 // pred_region
        %s326 = ssub.s32 %s23, 1
        // Predicated region
        $region49: #{tpu_custom_call.1} parent=47 // pred_check
          %p327 = pneg %p44
        $region50: #{tpu_custom_call.1} parent=47 // pred_check_branch
          %329 = sbr.rel (%p327) target = $region52
        $region51: #{tpu_custom_call.1} parent=47 // pred_region
          %330 = dma.done [#allocation6], 128
        $region52: #{tpu_custom_call.1} parent=47 // pred_fallthru
          _
        // Predicated region
        $region53: #{tpu_custom_call.1} parent=47 // pred_check
          %p331 = pneg %p65
        $region54: #{tpu_custom_call.1} parent=47 // pred_check_branch
          %333 = sbr.rel (%p331) target = $region56
        $region55: #{tpu_custom_call.1} parent=47 // pred_region
          %334 = dma.done [#allocation8], 1024
        $region56: #{tpu_custom_call.1} parent=47 // pred_fallthru
          _
        // Predicated region
        $region57: #{tpu_custom_call.1} parent=47 // pred_check
          %p335 = pneg %p86
        $region58: #{tpu_custom_call.1} parent=47 // pred_check_branch
          %337 = sbr.rel (%p335) target = $region60
        $region59: #{tpu_custom_call.1} parent=47 // pred_region
          %338 = dma.done [#allocation8], 128
        $region60: #{tpu_custom_call.1} parent=47 // pred_fallthru
          _
        %s339 = sand.u32 %s28, 1
        %s340 = scalar_lea.sflag [#allocation11], %s339
        %s341 = sand.u32 %s99, 1
        %s342 = smul.addr %s341, 1024
        %s343 = scalar_lea.vmem [#allocation10], %s342
        // Predicated region
        $region61: #{tpu_custom_call.1} parent=47 // pred_check
          %p344 = pneg %p112
        $region62: #{tpu_custom_call.1} parent=47 // pred_check_branch
          %346 = sbr.rel (%p344) target = $region64
        $region63: #{tpu_custom_call.1} parent=47 // pred_region
          %347 = dma.done %s340, 16384
        $region64: #{tpu_custom_call.1} parent=47 // pred_fallthru
          _
        %s348 = sand.u32 %s28, 1
        %s349 = scalar_lea.sflag [#allocation11], %s348
        %s350 = sand.u32 %s125, 1
        %s351 = smul.addr %s350, 2
        %s352 = scalar_lea.vmem [#allocation12], %s351
        // Predicated region
        $region65: #{tpu_custom_call.1} parent=47 // pred_check
          %p353 = pneg %p138
        $region66: #{tpu_custom_call.1} parent=47 // pred_check_branch
          %355 = sbr.rel (%p353) target = $region68
        $region67: #{tpu_custom_call.1} parent=47 // pred_region
          %356 = dma.done %s349, 32
        $region68: #{tpu_custom_call.1} parent=47 // pred_fallthru
          _
        %s357 = sand.u32 %s151, 1
        %s358 = scalar_lea.sflag [#allocation14], %s357
        %s359 = sand.u32 %s151, 1
        %s360 = smul.addr %s359, 2
        %s361 = scalar_lea.vmem [#allocation13], %s360
        // Predicated region
        $region69: #{tpu_custom_call.1} parent=47 // pred_check
          %p362 = pneg %p164
        $region70: #{tpu_custom_call.1} parent=47 // pred_check_branch
          %364 = sbr.rel (%p362) target = $region72
        $region71: #{tpu_custom_call.1} parent=47 // pred_region
          %365 = dma.done %s358, 32
        $region72: #{tpu_custom_call.1} parent=47 // pred_fallthru
          _
        %p366 = pneg %p44
        %p367 = pneg %p41
        %p368 = pneg %p65
        %p369 = pneg %p62
        %p370 = pneg %p86
        %p371 = pneg %p83
        %s372 = sand.u32 %s28, 1
        %s373 = scalar_lea.sflag [#allocation11], %s372
        %s374 = sand.u32 %s99, 1
        %s375 = smul.addr %s374, 1024
        %s376 = scalar_lea.vmem [#allocation10], %s375
        %p377 = pneg %p112
        %p378 = pneg %p109
        %s379 = sand.u32 %s28, 1
        %s380 = scalar_lea.sflag [#allocation11], %s379
        %s381 = sand.u32 %s125, 1
        %s382 = smul.addr %s381, 2
        %s383 = scalar_lea.vmem [#allocation12], %s382
        %p384 = pneg %p138
        %p385 = pneg %p135
        %s386 = sand.u32 %s151, 1
        %s387 = scalar_lea.sflag [#allocation14], %s386
        %s388 = sand.u32 %s151, 1
        %s389 = smul.addr %s388, 2
        %s390 = scalar_lea.vmem [#allocation13], %s389
        %p391 = pneg %p164
        %p392 = pneg %p161
        %p393 = pneg %p185
        %p394 = pneg %p182
        %p395 = pneg %p206
        %p396 = pneg %p203
        %s397 = smul.u32 2, %s28
        %s398 = smul.u32 2, %s28
        %s399 = smul.u32 2, %s28
        %p400 = scmp.eq.s32.totalorder %s28, 0
        // Predicated region
        $region73: #{tpu_custom_call.1} parent=47 // pred_check
          %p401 = pneg %p400
        $region74: #{tpu_custom_call.1} parent=47 // pred_check_branch
          %403 = sbr.rel (%p401) target = $region76
        $region75: #{tpu_custom_call.1} parent=47 // pred_region
          %v404 = vld [vmem:[#allocation5] sm:$0xff]
          %v405 = vld [vmem:[#allocation7] sm:$0xff]
          %v406 = vld [vmem:[#allocation7 + $0x8] sm:$0xff]
          %v407 = vld [vmem:[#allocation7 + $0x10] sm:$0xff]
          %v408 = vld [vmem:[#allocation7 + $0x18] sm:$0xff]
          %v409 = vld [vmem:[#allocation7 + $0x20] sm:$0xff]
          %v410 = vld [vmem:[#allocation7 + $0x28] sm:$0xff]
          %v411 = vld [vmem:[#allocation7 + $0x30] sm:$0xff]
          %v412 = vld [vmem:[#allocation7 + $0x38] sm:$0xff]
          %v413 = vld [vmem:[#allocation9] sm:$0xff]
          %v415 = vlaneseq
          %v416 = vshrl.u32 %v415, 7
          %v417 = vsub.s32 0, %v416
          %v418 = vrot.slane %v413, %v417
          %v419 = vlaneseq
          %v420 = vshrl.u32 %v419, 7
          %v421 = vsub.s32 1, %v420
          %v422 = vrot.slane %v413, %v421
          %v423 = vlaneseq
          %v424 = vshrl.u32 %v423, 7
          %v425 = vsub.s32 2, %v424
          %v426 = vrot.slane %v413, %v425
          %v427 = vlaneseq
          %v428 = vshrl.u32 %v427, 7
          %v429 = vsub.s32 3, %v428
          %v430 = vrot.slane %v413, %v429
          %v431 = vlaneseq
          %v432 = vshrl.u32 %v431, 7
          %v433 = vsub.s32 4, %v432
          %v434 = vrot.slane %v413, %v433
          %v435 = vlaneseq
          %v436 = vshrl.u32 %v435, 7
          %v437 = vsub.s32 5, %v436
          %v438 = vrot.slane %v413, %v437
          %v439 = vlaneseq
          %v440 = vshrl.u32 %v439, 7
          %v441 = vsub.s32 6, %v440
          %v442 = vrot.slane %v413, %v441
          %v443 = vlaneseq
          %v444 = vshrl.u32 %v443, 7
          %v445 = vsub.s32 7, %v444
          %v446 = vrot.slane %v413, %v445
          %vm455 = vcmask 64512
          %v457 = vsel %vm455, %v404, 0
          %459 = vmatprep.subr.mxu0 %v406
          %460 = vmatpush1.msra.mxu0 %v405
          %461 = vmatprep.subr.mxu0 0.0
          %462 = vmatpush1.msra.mxu0 0.0
          %463 = vmatprep.subr.mxu0 0.0
          %464 = vmatpush1.msra.mxu0 0.0
          %465 = vmatprep.subr.mxu0 0.0
          %466 = vmatpush1.msra.mxu0 0.0
          %467 = vmatprep.subr.mxu0 0.0
          %468 = vmatpush1.msra.mxu0 0.0
          %469 = vmatprep.subr.mxu0 0.0
          %470 = vmatpush1.msra.mxu0 0.0
          %471 = vmatprep.subr.mxu0 0.0
          %472 = vmatpush1.msra.mxu0 0.0
          %473 = vmatprep.subr.mxu0 0.0
          %474 = vmatpush1.msra.mxu0 0.0
          %475 = vmatprep.subr.mxu0 0.0
          %476 = vmatpush1.msra.mxu0 0.0
          %477 = vmatprep.subr.mxu0 0.0
          %478 = vmatpush1.msra.mxu0 0.0
          %479 = vmatprep.subr.mxu0 0.0
          %480 = vmatpush1.msra.mxu0 0.0
          %481 = vmatprep.subr.mxu0 0.0
          %482 = vmatpush1.msra.mxu0 0.0
          %483 = vmatprep.subr.mxu0 0.0
          %484 = vmatpush1.msra.mxu0 0.0
          %485 = vmatprep.subr.mxu0 0.0
          %486 = vmatpush1.msra.mxu0 0.0
          %487 = vmatprep.subr.mxu0 0.0
          %488 = vmatpush1.msra.mxu0 0.0
          %489 = vmatprep.subr.mxu0 0.0
          %490 = vmatpush1.msra.mxu0 0.0
          %491 = vmatprep.subr.mxu0 0.0
          %492 = vmatpush1.msra.mxu0 0.0
          %493 = vmatprep.subr.mxu0 0.0
          %494 = vmatpush1.msra.mxu0 0.0
          %495 = vmatprep.subr.mxu0 0.0
          %496 = vmatpush1.msra.mxu0 0.0
          %497 = vmatprep.subr.mxu0 0.0
          %498 = vmatpush1.msra.mxu0 0.0
          %499 = vmatprep.subr.mxu0 0.0
          %500 = vmatpush1.msra.mxu0 0.0
          %501 = vmatprep.subr.mxu0 0.0
          %502 = vmatpush1.msra.mxu0 0.0
          %503 = vmatprep.subr.mxu0 0.0
          %504 = vmatpush1.msra.mxu0 0.0
          %505 = vmatprep.subr.mxu0 0.0
          %506 = vmatpush1.msra.mxu0 0.0
          %507 = vmatprep.subr.mxu0 0.0
          %508 = vmatpush1.msra.mxu0 0.0
          %509 = vmatprep.subr.mxu0 0.0
          %510 = vmatpush1.msra.mxu0 0.0
          %511 = vmatprep.subr.mxu0 0.0
          %512 = vmatpush1.msra.mxu0 0.0
          %513 = vmatprep.subr.mxu0 0.0
          %514 = vmatpush1.msra.mxu0 0.0
          %515 = vmatprep.subr.mxu0 0.0
          %516 = vmatpush1.msra.mxu0 0.0
          %517 = vmatprep.subr.mxu0 0.0
          %518 = vmatpush1.msra.mxu0 0.0
          %519 = vmatprep.subr.mxu0 0.0
          %520 = vmatpush1.msra.mxu0 0.0
          %521 = vmatprep.subr.mxu0 0.0
          %522 = vmatpush1.msra.mxu0 0.0
          %523 = vmatprep.mubr.f32.mxu0 0.0
          %524 = vmatmul.mubr.f32.gmra.mrb[0].mxu0 %v457
          %v525 = vpop.f32.mrb[0].mxu0
          %v526 = vadd.f32 %v418, %v525
          %v527 = vpop.f32.mrb[0].mxu0
          %v528 = vadd.f32 %v422, %v527
          %529 = vdwg.mxu0
          %530 = vmatprep.subr.mxu0 %v408
          %531 = vmatpush1.msra.mxu0 %v407
          %532 = vmatprep.subr.mxu0 0.0
          %533 = vmatpush1.msra.mxu0 0.0
          %534 = vmatprep.subr.mxu0 0.0
          %535 = vmatpush1.msra.mxu0 0.0
          %536 = vmatprep.subr.mxu0 0.0
          %537 = vmatpush1.msra.mxu0 0.0
          %538 = vmatprep.subr.mxu0 0.0
          %539 = vmatpush1.msra.mxu0 0.0
          %540 = vmatprep.subr.mxu0 0.0
          %541 = vmatpush1.msra.mxu0 0.0
          %542 = vmatprep.subr.mxu0 0.0
          %543 = vmatpush1.msra.mxu0 0.0
          %544 = vmatprep.subr.mxu0 0.0
          %545 = vmatpush1.msra.mxu0 0.0
          %546 = vmatprep.subr.mxu0 0.0
          %547 = vmatpush1.msra.mxu0 0.0
          %548 = vmatprep.subr.mxu0 0.0
          %549 = vmatpush1.msra.mxu0 0.0
          %550 = vmatprep.subr.mxu0 0.0
          %551 = vmatpush1.msra.mxu0 0.0
          %552 = vmatprep.subr.mxu0 0.0
          %553 = vmatpush1.msra.mxu0 0.0
          %554 = vmatprep.subr.mxu0 0.0
          %555 = vmatpush1.msra.mxu0 0.0
          %556 = vmatprep.subr.mxu0 0.0
          %557 = vmatpush1.msra.mxu0 0.0
          %558 = vmatprep.subr.mxu0 0.0
          %559 = vmatpush1.msra.mxu0 0.0
          %560 = vmatprep.subr.mxu0 0.0
          %561 = vmatpush1.msra.mxu0 0.0
          %562 = vmatprep.subr.mxu0 0.0
          %563 = vmatpush1.msra.mxu0 0.0
          %564 = vmatprep.subr.mxu0 0.0
          %565 = vmatpush1.msra.mxu0 0.0
          %566 = vmatprep.subr.mxu0 0.0
          %567 = vmatpush1.msra.mxu0 0.0
          %568 = vmatprep.subr.mxu0 0.0
          %569 = vmatpush1.msra.mxu0 0.0
          %570 = vmatprep.subr.mxu0 0.0
          %571 = vmatpush1.msra.mxu0 0.0
          %572 = vmatprep.subr.mxu0 0.0
          %573 = vmatpush1.msra.mxu0 0.0
          %574 = vmatprep.subr.mxu0 0.0
          %575 = vmatpush1.msra.mxu0 0.0
          %576 = vmatprep.subr.mxu0 0.0
          %577 = vmatpush1.msra.mxu0 0.0
          %578 = vmatprep.subr.mxu0 0.0
          %579 = vmatpush1.msra.mxu0 0.0
          %580 = vmatprep.subr.mxu0 0.0
          %581 = vmatpush1.msra.mxu0 0.0
          %582 = vmatprep.subr.mxu0 0.0
          %583 = vmatpush1.msra.mxu0 0.0
          %584 = vmatprep.subr.mxu0 0.0
          %585 = vmatpush1.msra.mxu0 0.0
          %586 = vmatprep.subr.mxu0 0.0
          %587 = vmatpush1.msra.mxu0 0.0
          %588 = vmatprep.subr.mxu0 0.0
          %589 = vmatpush1.msra.mxu0 0.0
          %590 = vmatprep.subr.mxu0 0.0
          %591 = vmatpush1.msra.mxu0 0.0
          %592 = vmatprep.subr.mxu0 0.0
          %593 = vmatpush1.msra.mxu0 0.0
          %594 = vmatprep.mubr.f32.mxu0 0.0
          %595 = vmatmul.mubr.f32.gmra.mrb[0].mxu0 %v457
          %v596 = vpop.f32.mrb[0].mxu0
          %v597 = vadd.f32 %v426, %v596
          %v598 = vpop.f32.mrb[0].mxu0
          %v599 = vadd.f32 %v430, %v598
          %600 = vdwg.mxu0
          %601 = vmatprep.subr.mxu0 %v410
          %602 = vmatpush1.msra.mxu0 %v409
          %603 = vmatprep.subr.mxu0 0.0
          %604 = vmatpush1.msra.mxu0 0.0
          %605 = vmatprep.subr.mxu0 0.0
          %606 = vmatpush1.msra.mxu0 0.0
          %607 = vmatprep.subr.mxu0 0.0
          %608 = vmatpush1.msra.mxu0 0.0
          %609 = vmatprep.subr.mxu0 0.0
          %610 = vmatpush1.msra.mxu0 0.0
          %611 = vmatprep.subr.mxu0 0.0
          %612 = vmatpush1.msra.mxu0 0.0
          %613 = vmatprep.subr.mxu0 0.0
          %614 = vmatpush1.msra.mxu0 0.0
          %615 = vmatprep.subr.mxu0 0.0
          %616 = vmatpush1.msra.mxu0 0.0
          %617 = vmatprep.subr.mxu0 0.0
          %618 = vmatpush1.msra.mxu0 0.0
          %619 = vmatprep.subr.mxu0 0.0
          %620 = vmatpush1.msra.mxu0 0.0
          %621 = vmatprep.subr.mxu0 0.0
          %622 = vmatpush1.msra.mxu0 0.0
          %623 = vmatprep.subr.mxu0 0.0
          %624 = vmatpush1.msra.mxu0 0.0
          %625 = vmatprep.subr.mxu0 0.0
          %626 = vmatpush1.msra.mxu0 0.0
          %627 = vmatprep.subr.mxu0 0.0
          %628 = vmatpush1.msra.mxu0 0.0
          %629 = vmatprep.subr.mxu0 0.0
          %630 = vmatpush1.msra.mxu0 0.0
          %631 = vmatprep.subr.mxu0 0.0
          %632 = vmatpush1.msra.mxu0 0.0
          %633 = vmatprep.subr.mxu0 0.0
          %634 = vmatpush1.msra.mxu0 0.0
          %635 = vmatprep.subr.mxu0 0.0
          %636 = vmatpush1.msra.mxu0 0.0
          %637 = vmatprep.subr.mxu0 0.0
          %638 = vmatpush1.msra.mxu0 0.0
          %639 = vmatprep.subr.mxu0 0.0
          %640 = vmatpush1.msra.mxu0 0.0
          %641 = vmatprep.subr.mxu0 0.0
          %642 = vmatpush1.msra.mxu0 0.0
          %643 = vmatprep.subr.mxu0 0.0
          %644 = vmatpush1.msra.mxu0 0.0
          %645 = vmatprep.subr.mxu0 0.0
          %646 = vmatpush1.msra.mxu0 0.0
          %647 = vmatprep.subr.mxu0 0.0
          %648 = vmatpush1.msra.mxu0 0.0
          %649 = vmatprep.subr.mxu0 0.0
          %650 = vmatpush1.msra.mxu0 0.0
          %651 = vmatprep.subr.mxu0 0.0
          %652 = vmatpush1.msra.mxu0 0.0
          %653 = vmatprep.subr.mxu0 0.0
          %654 = vmatpush1.msra.mxu0 0.0
          %655 = vmatprep.subr.mxu0 0.0
          %656 = vmatpush1.msra.mxu0 0.0
          %657 = vmatprep.subr.mxu0 0.0
          %658 = vmatpush1.msra.mxu0 0.0
          %659 = vmatprep.subr.mxu0 0.0
          %660 = vmatpush1.msra.mxu0 0.0
          %661 = vmatprep.subr.mxu0 0.0
          %662 = vmatpush1.msra.mxu0 0.0
          %663 = vmatprep.subr.mxu0 0.0
          %664 = vmatpush1.msra.mxu0 0.0
          %665 = vmatprep.mubr.f32.mxu0 0.0
          %666 = vmatmul.mubr.f32.gmra.mrb[0].mxu0 %v457
          %v667 = vpop.f32.mrb[0].mxu0
          %v668 = vadd.f32 %v434, %v667
          %v669 = vpop.f32.mrb[0].mxu0
          %v670 = vadd.f32 %v438, %v669
          %671 = vdwg.mxu0
          %672 = vmatprep.subr.mxu0 %v412
          %673 = vmatpush1.msra.mxu0 %v411
          %674 = vmatprep.subr.mxu0 0.0
          %675 = vmatpush1.msra.mxu0 0.0
          %676 = vmatprep.subr.mxu0 0.0
          %677 = vmatpush1.msra.mxu0 0.0
          %678 = vmatprep.subr.mxu0 0.0
          %679 = vmatpush1.msra.mxu0 0.0
          %680 = vmatprep.subr.mxu0 0.0
          %681 = vmatpush1.msra.mxu0 0.0
          %682 = vmatprep.subr.mxu0 0.0
          %683 = vmatpush1.msra.mxu0 0.0
          %684 = vmatprep.subr.mxu0 0.0
          %685 = vmatpush1.msra.mxu0 0.0
          %686 = vmatprep.subr.mxu0 0.0
          %687 = vmatpush1.msra.mxu0 0.0
          %688 = vmatprep.subr.mxu0 0.0
          %689 = vmatpush1.msra.mxu0 0.0
          %690 = vmatprep.subr.mxu0 0.0
          %691 = vmatpush1.msra.mxu0 0.0
          %692 = vmatprep.subr.mxu0 0.0
          %693 = vmatpush1.msra.mxu0 0.0
          %694 = vmatprep.subr.mxu0 0.0
          %695 = vmatpush1.msra.mxu0 0.0
          %696 = vmatprep.subr.mxu0 0.0
          %697 = vmatpush1.msra.mxu0 0.0
          %698 = vmatprep.subr.mxu0 0.0
          %699 = vmatpush1.msra.mxu0 0.0
          %700 = vmatprep.subr.mxu0 0.0
          %701 = vmatpush1.msra.mxu0 0.0
          %702 = vmatprep.subr.mxu0 0.0
          %703 = vmatpush1.msra.mxu0 0.0
          %704 = vmatprep.subr.mxu0 0.0
          %705 = vmatpush1.msra.mxu0 0.0
          %706 = vmatprep.subr.mxu0 0.0
          %707 = vmatpush1.msra.mxu0 0.0
          %708 = vmatprep.subr.mxu0 0.0
          %709 = vmatpush1.msra.mxu0 0.0
          %710 = vmatprep.subr.mxu0 0.0
          %711 = vmatpush1.msra.mxu0 0.0
          %712 = vmatprep.subr.mxu0 0.0
          %713 = vmatpush1.msra.mxu0 0.0
          %714 = vmatprep.subr.mxu0 0.0
          %715 = vmatpush1.msra.mxu0 0.0
          %716 = vmatprep.subr.mxu0 0.0
          %717 = vmatpush1.msra.mxu0 0.0
          %718 = vmatprep.subr.mxu0 0.0
          %719 = vmatpush1.msra.mxu0 0.0
          %720 = vmatprep.subr.mxu0 0.0
          %721 = vmatpush1.msra.mxu0 0.0
          %722 = vmatprep.subr.mxu0 0.0
          %723 = vmatpush1.msra.mxu0 0.0
          %724 = vmatprep.subr.mxu0 0.0
          %725 = vmatpush1.msra.mxu0 0.0
          %726 = vmatprep.subr.mxu0 0.0
          %727 = vmatpush1.msra.mxu0 0.0
          %728 = vmatprep.subr.mxu0 0.0
          %729 = vmatpush1.msra.mxu0 0.0
          %730 = vmatprep.subr.mxu0 0.0
          %731 = vmatpush1.msra.mxu0 0.0
          %732 = vmatprep.subr.mxu0 0.0
          %733 = vmatpush1.msra.mxu0 0.0
          %734 = vmatprep.subr.mxu0 0.0
          %735 = vmatpush1.msra.mxu0 0.0
          %736 = vmatprep.mubr.f32.mxu0 0.0
          %737 = vmatmul.mubr.f32.gmra.mrb[0].mxu0 %v457
          %v738 = vpop.f32.mrb[0].mxu0
          %v739 = vadd.f32 %v442, %v738
          %v740 = vpop.f32.mrb[0].mxu0
          %v741 = vadd.f32 %v446, %v740
          %742 = vdwg.mxu0
          %v743 = vmax.f32 %v526, 0.0
          %v744 = vmax.f32 %v528, 0.0
          %v745 = vmax.f32 %v597, 0.0
          %v746 = vmax.f32 %v599, 0.0
          %v747 = vmax.f32 %v668, 0.0
          %v748 = vmax.f32 %v670, 0.0
          %v749 = vmax.f32 %v739, 0.0
          %v750 = vmax.f32 %v741, 0.0
          %v751 = vpack.c.bf16 %v743, %v743
          %v752 = vpack.c.bf16 %v744, %v744
          %v753 = vpack.c.bf16 %v745, %v745
          %v754 = vpack.c.bf16 %v746, %v746
          %v755 = vpack.c.bf16 %v747, %v747
          %v756 = vpack.c.bf16 %v748, %v748
          %v757 = vpack.c.bf16 %v749, %v749
          %v758 = vpack.c.bf16 %v750, %v750
          %v767 = vunpack.c.l.b16 %v751
          %v768 = vunpack.c.l.b16 %v752
          %v769 = vunpack.c.l.b16 %v753
          %v770 = vunpack.c.l.b16 %v754
          %v771 = vunpack.c.l.b16 %v755
          %v772 = vunpack.c.l.b16 %v756
          %v773 = vunpack.c.l.b16 %v757
          %v774 = vunpack.c.l.b16 %v758
          %v775 = vpack.c.b16 %v768, %v767
          %v776 = vpack.c.b16 %v770, %v769
          %v777 = vpack.c.b16 %v772, %v771
          %v778 = vpack.c.b16 %v774, %v773
          %783 = vst [vmem:[#allocation2] sm:$0xff] %v775
          %784 = vst [vmem:[#allocation2 + $0x8] sm:$0xff] %v776
          %785 = vst [vmem:[#allocation2 + $0x10] sm:$0xff] %v777
          %786 = vst [vmem:[#allocation2 + $0x18] sm:$0xff] %v778
          %vm787 = vcmask 7168
          %788 = vst.msk [vmem:[#allocation3] sm:$0xff] %vm787, 0.0
        $region76: #{tpu_custom_call.1} parent=47 // pred_fallthru
          _
        %v789 = vld [vmem:[#allocation2] sm:$0xff]
        %v790 = vld [vmem:[#allocation2 + $0x8] sm:$0xff]
        %v791 = vld [vmem:[#allocation2 + $0x10] sm:$0xff]
        %v792 = vld [vmem:[#allocation2 + $0x18] sm:$0xff]
        %v793 = vld [vmem:[%s343] sm:$0xff]
        %v794 = vld [vmem:[%s343 + $0x8] sm:$0xff]
        %v795 = vld [vmem:[%s343 + $0x10] sm:$0xff]
        %v796 = vld [vmem:[%s343 + $0x18] sm:$0xff]
        %v797 = vld [vmem:[%s343 + $0x20] sm:$0xff]
        %v798 = vld [vmem:[%s343 + $0x28] sm:$0xff]
        %v799 = vld [vmem:[%s343 + $0x30] sm:$0xff]
        %v800 = vld [vmem:[%s343 + $0x38] sm:$0xff]
        %v801 = vld [vmem:[%s343 + $0x40] sm:$0xff]
        %v802 = vld [vmem:[%s343 + $0x48] sm:$0xff]
        %v803 = vld [vmem:[%s343 + $0x50] sm:$0xff]
        %v804 = vld [vmem:[%s343 + $0x58] sm:$0xff]
        %v805 = vld [vmem:[%s343 + $0x60] sm:$0xff]
        %v806 = vld [vmem:[%s343 + $0x68] sm:$0xff]
        %v807 = vld [vmem:[%s343 + $0x70] sm:$0xff]
        %v808 = vld [vmem:[%s343 + $0x78] sm:$0xff]
        %v809 = vld [vmem:[%s343 + $0x80] sm:$0xff]
        %v810 = vld [vmem:[%s343 + $0x88] sm:$0xff]
        %v811 = vld [vmem:[%s343 + $0x90] sm:$0xff]
        %v812 = vld [vmem:[%s343 + $0x98] sm:$0xff]
        %v813 = vld [vmem:[%s343 + $0xa0] sm:$0xff]
        %v814 = vld [vmem:[%s343 + $0xa8] sm:$0xff]
        %v815 = vld [vmem:[%s343 + $0xb0] sm:$0xff]
        %v816 = vld [vmem:[%s343 + $0xb8] sm:$0xff]
        %v817 = vld [vmem:[%s343 + $0xc0] sm:$0xff]
        %v818 = vld [vmem:[%s343 + $0xc8] sm:$0xff]
        %v819 = vld [vmem:[%s343 + $0xd0] sm:$0xff]
        %v820 = vld [vmem:[%s343 + $0xd8] sm:$0xff]
        %v821 = vld [vmem:[%s343 + $0xe0] sm:$0xff]
        %v822 = vld [vmem:[%s343 + $0xe8] sm:$0xff]
        %v823 = vld [vmem:[%s343 + $0xf0] sm:$0xff]
        %v824 = vld [vmem:[%s343 + $0xf8] sm:$0xff]
        %v825 = vld [vmem:[%s343 + $0x100] sm:$0xff]
        %v826 = vld [vmem:[%s343 + $0x108] sm:$0xff]
        %v827 = vld [vmem:[%s343 + $0x110] sm:$0xff]
        %v828 = vld [vmem:[%s343 + $0x118] sm:$0xff]
        %v829 = vld [vmem:[%s343 + $0x120] sm:$0xff]
        %v830 = vld [vmem:[%s343 + $0x128] sm:$0xff]
        %v831 = vld [vmem:[%s343 + $0x130] sm:$0xff]
        %v832 = vld [vmem:[%s343 + $0x138] sm:$0xff]
        %v833 = vld [vmem:[%s343 + $0x140] sm:$0xff]
        %v834 = vld [vmem:[%s343 + $0x148] sm:$0xff]
        %v835 = vld [vmem:[%s343 + $0x150] sm:$0xff]
        %v836 = vld [vmem:[%s343 + $0x158] sm:$0xff]
        %v837 = vld [vmem:[%s343 + $0x160] sm:$0xff]
        %v838 = vld [vmem:[%s343 + $0x168] sm:$0xff]
        %v839 = vld [vmem:[%s343 + $0x170] sm:$0xff]
        %v840 = vld [vmem:[%s343 + $0x178] sm:$0xff]
        %v841 = vld [vmem:[%s343 + $0x180] sm:$0xff]
        %v842 = vld [vmem:[%s343 + $0x188] sm:$0xff]
        %v843 = vld [vmem:[%s343 + $0x190] sm:$0xff]
        %v844 = vld [vmem:[%s343 + $0x198] sm:$0xff]
        %v845 = vld [vmem:[%s343 + $0x1a0] sm:$0xff]
        %v846 = vld [vmem:[%s343 + $0x1a8] sm:$0xff]
        %v847 = vld [vmem:[%s343 + $0x1b0] sm:$0xff]
        %v848 = vld [vmem:[%s343 + $0x1b8] sm:$0xff]
        %v849 = vld [vmem:[%s343 + $0x1c0] sm:$0xff]
        %v850 = vld [vmem:[%s343 + $0x1c8] sm:$0xff]
        %v851 = vld [vmem:[%s343 + $0x1d0] sm:$0xff]
        %v852 = vld [vmem:[%s343 + $0x1d8] sm:$0xff]
        %v853 = vld [vmem:[%s343 + $0x1e0] sm:$0xff]
        %v854 = vld [vmem:[%s343 + $0x1e8] sm:$0xff]
        %v855 = vld [vmem:[%s343 + $0x1f0] sm:$0xff]
        %v856 = vld [vmem:[%s343 + $0x1f8] sm:$0xff]
        %v857 = vld [vmem:[%s343 + $0x200] sm:$0xff]
        %v858 = vld [vmem:[%s343 + $0x208] sm:$0xff]
        %v859 = vld [vmem:[%s343 + $0x210] sm:$0xff]
        %v860 = vld [vmem:[%s343 + $0x218] sm:$0xff]
        %v861 = vld [vmem:[%s343 + $0x220] sm:$0xff]
        %v862 = vld [vmem:[%s343 + $0x228] sm:$0xff]
        %v863 = vld [vmem:[%s343 + $0x230] sm:$0xff]
        %v864 = vld [vmem:[%s343 + $0x238] sm:$0xff]
        %v865 = vld [vmem:[%s343 + $0x240] sm:$0xff]
        %v866 = vld [vmem:[%s343 + $0x248] sm:$0xff]
        %v867 = vld [vmem:[%s343 + $0x250] sm:$0xff]
        %v868 = vld [vmem:[%s343 + $0x258] sm:$0xff]
        %v869 = vld [vmem:[%s343 + $0x260] sm:$0xff]
        %v870 = vld [vmem:[%s343 + $0x268] sm:$0xff]
        %v871 = vld [vmem:[%s343 + $0x270] sm:$0xff]
        %v872 = vld [vmem:[%s343 + $0x278] sm:$0xff]
        %v873 = vld [vmem:[%s343 + $0x280] sm:$0xff]
        %v874 = vld [vmem:[%s343 + $0x288] sm:$0xff]
        %v875 = vld [vmem:[%s343 + $0x290] sm:$0xff]
        %v876 = vld [vmem:[%s343 + $0x298] sm:$0xff]
        %v877 = vld [vmem:[%s343 + $0x2a0] sm:$0xff]
        %v878 = vld [vmem:[%s343 + $0x2a8] sm:$0xff]
        %v879 = vld [vmem:[%s343 + $0x2b0] sm:$0xff]
        %v880 = vld [vmem:[%s343 + $0x2b8] sm:$0xff]
        %v881 = vld [vmem:[%s343 + $0x2c0] sm:$0xff]
        %v882 = vld [vmem:[%s343 + $0x2c8] sm:$0xff]
        %v883 = vld [vmem:[%s343 + $0x2d0] sm:$0xff]
        %v884 = vld [vmem:[%s343 + $0x2d8] sm:$0xff]
        %v885 = vld [vmem:[%s343 + $0x2e0] sm:$0xff]
        %v886 = vld [vmem:[%s343 + $0x2e8] sm:$0xff]
        %v887 = vld [vmem:[%s343 + $0x2f0] sm:$0xff]
        %v888 = vld [vmem:[%s343 + $0x2f8] sm:$0xff]
        %v889 = vld [vmem:[%s343 + $0x300] sm:$0xff]
        %v890 = vld [vmem:[%s343 + $0x308] sm:$0xff]
        %v891 = vld [vmem:[%s343 + $0x310] sm:$0xff]
        %v892 = vld [vmem:[%s343 + $0x318] sm:$0xff]
        %v893 = vld [vmem:[%s343 + $0x320] sm:$0xff]
        %v894 = vld [vmem:[%s343 + $0x328] sm:$0xff]
        %v895 = vld [vmem:[%s343 + $0x330] sm:$0xff]
        %v896 = vld [vmem:[%s343 + $0x338] sm:$0xff]
        %v897 = vld [vmem:[%s343 + $0x340] sm:$0xff]
        %v898 = vld [vmem:[%s343 + $0x348] sm:$0xff]
        %v899 = vld [vmem:[%s343 + $0x350] sm:$0xff]
        %v900 = vld [vmem:[%s343 + $0x358] sm:$0xff]
        %v901 = vld [vmem:[%s343 + $0x360] sm:$0xff]
        %v902 = vld [vmem:[%s343 + $0x368] sm:$0xff]
        %v903 = vld [vmem:[%s343 + $0x370] sm:$0xff]
        %v904 = vld [vmem:[%s343 + $0x378] sm:$0xff]
        %v905 = vld [vmem:[%s343 + $0x380] sm:$0xff]
        %v906 = vld [vmem:[%s343 + $0x388] sm:$0xff]
        %v907 = vld [vmem:[%s343 + $0x390] sm:$0xff]
        %v908 = vld [vmem:[%s343 + $0x398] sm:$0xff]
        %v909 = vld [vmem:[%s343 + $0x3a0] sm:$0xff]
        %v910 = vld [vmem:[%s343 + $0x3a8] sm:$0xff]
        %v911 = vld [vmem:[%s343 + $0x3b0] sm:$0xff]
        %v912 = vld [vmem:[%s343 + $0x3b8] sm:$0xff]
        %v913 = vld [vmem:[%s343 + $0x3c0] sm:$0xff]
        %v914 = vld [vmem:[%s343 + $0x3c8] sm:$0xff]
        %v915 = vld [vmem:[%s343 + $0x3d0] sm:$0xff]
        %v916 = vld [vmem:[%s343 + $0x3d8] sm:$0xff]
        %v917 = vld [vmem:[%s343 + $0x3e0] sm:$0xff]
        %v918 = vld [vmem:[%s343 + $0x3e8] sm:$0xff]
        %v919 = vld [vmem:[%s343 + $0x3f0] sm:$0xff]
        %v920 = vld [vmem:[%s343 + $0x3f8] sm:$0xff]
        %v921 = vld [vmem:[%s352] sm:$0x3]
        %v923 = vlaneseq
        %v924 = vshrl.u32 %v923, 7
        %v925 = vsub.s32 0, %v924
        %v926 = vrot.slane %v921, %v925
        %v927 = vlaneseq
        %v928 = vshrl.u32 %v927, 7
        %v929 = vsub.s32 1, %v928
        %v930 = vrot.slane %v921, %v929
        %v937 = vunpack.c.l.b16 %v789
        %v938 = vunpack.c.h.b16 %v789
        %v939 = vunpack.c.l.b16 %v790
        %v940 = vunpack.c.h.b16 %v790
        %v941 = vunpack.c.l.b16 %v791
        %v942 = vunpack.c.h.b16 %v791
        %v943 = vunpack.c.l.b16 %v792
        %v944 = vunpack.c.h.b16 %v792
        %v945 = vpack.c.b16 %v937, %v937
        %v946 = vpack.c.b16 %v938, %v938
        %v947 = vpack.c.b16 %v939, %v939
        %v948 = vpack.c.b16 %v940, %v940
        %v949 = vpack.c.b16 %v941, %v941
        %v950 = vpack.c.b16 %v942, %v942
        %v951 = vpack.c.b16 %v943, %v943
        %v952 = vpack.c.b16 %v944, %v944
        %v1089 = vunpack.c.l.b16 %v793
        %v1090 = vunpack.c.h.b16 %v793
        %v1091 = vunpack.c.l.b16 %v794
        %v1092 = vunpack.c.h.b16 %v794
        %v1093 = vunpack.c.l.b16 %v795
        %v1094 = vunpack.c.h.b16 %v795
        %v1095 = vunpack.c.l.b16 %v796
        %v1096 = vunpack.c.h.b16 %v796
        %v1097 = vunpack.c.l.b16 %v797
        %v1098 = vunpack.c.h.b16 %v797
        %v1099 = vunpack.c.l.b16 %v798
        %v1100 = vunpack.c.h.b16 %v798
        %v1101 = vunpack.c.l.b16 %v799
        %v1102 = vunpack.c.h.b16 %v799
        %v1103 = vunpack.c.l.b16 %v800
        %v1104 = vunpack.c.h.b16 %v800
        %v1105 = vunpack.c.l.b16 %v801
        %v1106 = vunpack.c.h.b16 %v801
        %v1107 = vunpack.c.l.b16 %v802
        %v1108 = vunpack.c.h.b16 %v802
        %v1109 = vunpack.c.l.b16 %v803
        %v1110 = vunpack.c.h.b16 %v803
        %v1111 = vunpack.c.l.b16 %v804
        %v1112 = vunpack.c.h.b16 %v804
        %v1113 = vunpack.c.l.b16 %v805
        %v1114 = vunpack.c.h.b16 %v805
        %v1115 = vunpack.c.l.b16 %v806
        %v1116 = vunpack.c.h.b16 %v806
        %v1117 = vunpack.c.l.b16 %v807
        %v1118 = vunpack.c.h.b16 %v807
        %v1119 = vunpack.c.l.b16 %v808
        %v1120 = vunpack.c.h.b16 %v808
        %v1121 = vunpack.c.l.b16 %v809
        %v1122 = vunpack.c.h.b16 %v809
        %v1123 = vunpack.c.l.b16 %v810
        %v1124 = vunpack.c.h.b16 %v810
        %v1125 = vunpack.c.l.b16 %v811
        %v1126 = vunpack.c.h.b16 %v811
        %v1127 = vunpack.c.l.b16 %v812
        %v1128 = vunpack.c.h.b16 %v812
        %v1129 = vunpack.c.l.b16 %v813
        %v1130 = vunpack.c.h.b16 %v813
        %v1131 = vunpack.c.l.b16 %v814
        %v1132 = vunpack.c.h.b16 %v814
        %v1133 = vunpack.c.l.b16 %v815
        %v1134 = vunpack.c.h.b16 %v815
        %v1135 = vunpack.c.l.b16 %v816
        %v1136 = vunpack.c.h.b16 %v816
        %v1137 = vunpack.c.l.b16 %v817
        %v1138 = vunpack.c.h.b16 %v817
        %v1139 = vunpack.c.l.b16 %v818
        %v1140 = vunpack.c.h.b16 %v818
        %v1141 = vunpack.c.l.b16 %v819
        %v1142 = vunpack.c.h.b16 %v819
        %v1143 = vunpack.c.l.b16 %v820
        %v1144 = vunpack.c.h.b16 %v820
        %v1145 = vunpack.c.l.b16 %v821
        %v1146 = vunpack.c.h.b16 %v821
        %v1147 = vunpack.c.l.b16 %v822
        %v1148 = vunpack.c.h.b16 %v822
        %v1149 = vunpack.c.l.b16 %v823
        %v1150 = vunpack.c.h.b16 %v823
        %v1151 = vunpack.c.l.b16 %v824
        %v1152 = vunpack.c.h.b16 %v824
        %v1153 = vunpack.c.l.b16 %v825
        %v1154 = vunpack.c.h.b16 %v825
        %v1155 = vunpack.c.l.b16 %v826
        %v1156 = vunpack.c.h.b16 %v826
        %v1157 = vunpack.c.l.b16 %v827
        %v1158 = vunpack.c.h.b16 %v827
        %v1159 = vunpack.c.l.b16 %v828
        %v1160 = vunpack.c.h.b16 %v828
        %v1161 = vunpack.c.l.b16 %v829
        %v1162 = vunpack.c.h.b16 %v829
        %v1163 = vunpack.c.l.b16 %v830
        %v1164 = vunpack.c.h.b16 %v830
        %v1165 = vunpack.c.l.b16 %v831
        %v1166 = vunpack.c.h.b16 %v831
        %v1167 = vunpack.c.l.b16 %v832
        %v1168 = vunpack.c.h.b16 %v832
        %v1169 = vunpack.c.l.b16 %v833
        %v1170 = vunpack.c.h.b16 %v833
        %v1171 = vunpack.c.l.b16 %v834
        %v1172 = vunpack.c.h.b16 %v834
        %v1173 = vunpack.c.l.b16 %v835
        %v1174 = vunpack.c.h.b16 %v835
        %v1175 = vunpack.c.l.b16 %v836
        %v1176 = vunpack.c.h.b16 %v836
        %v1177 = vunpack.c.l.b16 %v837
        %v1178 = vunpack.c.h.b16 %v837
        %v1179 = vunpack.c.l.b16 %v838
        %v1180 = vunpack.c.h.b16 %v838
        %v1181 = vunpack.c.l.b16 %v839
        %v1182 = vunpack.c.h.b16 %v839
        %v1183 = vunpack.c.l.b16 %v840
        %v1184 = vunpack.c.h.b16 %v840
        %v1185 = vunpack.c.l.b16 %v841
        %v1186 = vunpack.c.h.b16 %v841
        %v1187 = vunpack.c.l.b16 %v842
        %v1188 = vunpack.c.h.b16 %v842
        %v1189 = vunpack.c.l.b16 %v843
        %v1190 = vunpack.c.h.b16 %v843
        %v1191 = vunpack.c.l.b16 %v844
        %v1192 = vunpack.c.h.b16 %v844
        %v1193 = vunpack.c.l.b16 %v845
        %v1194 = vunpack.c.h.b16 %v845
        %v1195 = vunpack.c.l.b16 %v846
        %v1196 = vunpack.c.h.b16 %v846
        %v1197 = vunpack.c.l.b16 %v847
        %v1198 = vunpack.c.h.b16 %v847
        %v1199 = vunpack.c.l.b16 %v848
        %v1200 = vunpack.c.h.b16 %v848
        %v1201 = vunpack.c.l.b16 %v849
        %v1202 = vunpack.c.h.b16 %v849
        %v1203 = vunpack.c.l.b16 %v850
        %v1204 = vunpack.c.h.b16 %v850
        %v1205 = vunpack.c.l.b16 %v851
        %v1206 = vunpack.c.h.b16 %v851
        %v1207 = vunpack.c.l.b16 %v852
        %v1208 = vunpack.c.h.b16 %v852
        %v1209 = vunpack.c.l.b16 %v853
        %v1210 = vunpack.c.h.b16 %v853
        %v1211 = vunpack.c.l.b16 %v854
        %v1212 = vunpack.c.h.b16 %v854
        %v1213 = vunpack.c.l.b16 %v855
        %v1214 = vunpack.c.h.b16 %v855
        %v1215 = vunpack.c.l.b16 %v856
        %v1216 = vunpack.c.h.b16 %v856
        %v1217 = vunpack.c.l.b16 %v857
        %v1218 = vunpack.c.h.b16 %v857
        %v1219 = vunpack.c.l.b16 %v858
        %v1220 = vunpack.c.h.b16 %v858
        %v1221 = vunpack.c.l.b16 %v859
        %v1222 = vunpack.c.h.b16 %v859
        %v1223 = vunpack.c.l.b16 %v860
        %v1224 = vunpack.c.h.b16 %v860
        %v1225 = vunpack.c.l.b16 %v861
        %v1226 = vunpack.c.h.b16 %v861
        %v1227 = vunpack.c.l.b16 %v862
        %v1228 = vunpack.c.h.b16 %v862
        %v1229 = vunpack.c.l.b16 %v863
        %v1230 = vunpack.c.h.b16 %v863
        %v1231 = vunpack.c.l.b16 %v864
        %v1232 = vunpack.c.h.b16 %v864
        %v1233 = vunpack.c.l.b16 %v865
        %v1234 = vunpack.c.h.b16 %v865
        %v1235 = vunpack.c.l.b16 %v866
        %v1236 = vunpack.c.h.b16 %v866
        %v1237 = vunpack.c.l.b16 %v867
        %v1238 = vunpack.c.h.b16 %v867
        %v1239 = vunpack.c.l.b16 %v868
        %v1240 = vunpack.c.h.b16 %v868
        %v1241 = vunpack.c.l.b16 %v869
        %v1242 = vunpack.c.h.b16 %v869
        %v1243 = vunpack.c.l.b16 %v870
        %v1244 = vunpack.c.h.b16 %v870
        %v1245 = vunpack.c.l.b16 %v871
        %v1246 = vunpack.c.h.b16 %v871
        %v1247 = vunpack.c.l.b16 %v872
        %v1248 = vunpack.c.h.b16 %v872
        %v1249 = vunpack.c.l.b16 %v873
        %v1250 = vunpack.c.h.b16 %v873
        %v1251 = vunpack.c.l.b16 %v874
        %v1252 = vunpack.c.h.b16 %v874
        %v1253 = vunpack.c.l.b16 %v875
        %v1254 = vunpack.c.h.b16 %v875
        %v1255 = vunpack.c.l.b16 %v876
        %v1256 = vunpack.c.h.b16 %v876
        %v1257 = vunpack.c.l.b16 %v877
        %v1258 = vunpack.c.h.b16 %v877
        %v1259 = vunpack.c.l.b16 %v878
        %v1260 = vunpack.c.h.b16 %v878
        %v1261 = vunpack.c.l.b16 %v879
        %v1262 = vunpack.c.h.b16 %v879
        %v1263 = vunpack.c.l.b16 %v880
        %v1264 = vunpack.c.h.b16 %v880
        %v1265 = vunpack.c.l.b16 %v881
        %v1266 = vunpack.c.h.b16 %v881
        %v1267 = vunpack.c.l.b16 %v882
        %v1268 = vunpack.c.h.b16 %v882
        %v1269 = vunpack.c.l.b16 %v883
        %v1270 = vunpack.c.h.b16 %v883
        %v1271 = vunpack.c.l.b16 %v884
        %v1272 = vunpack.c.h.b16 %v884
        %v1273 = vunpack.c.l.b16 %v885
        %v1274 = vunpack.c.h.b16 %v885
        %v1275 = vunpack.c.l.b16 %v886
        %v1276 = vunpack.c.h.b16 %v886
        %v1277 = vunpack.c.l.b16 %v887
        %v1278 = vunpack.c.h.b16 %v887
        %v1279 = vunpack.c.l.b16 %v888
        %v1280 = vunpack.c.h.b16 %v888
        %v1281 = vunpack.c.l.b16 %v889
        %v1282 = vunpack.c.h.b16 %v889
        %v1283 = vunpack.c.l.b16 %v890
        %v1284 = vunpack.c.h.b16 %v890
        %v1285 = vunpack.c.l.b16 %v891
        %v1286 = vunpack.c.h.b16 %v891
        %v1287 = vunpack.c.l.b16 %v892
        %v1288 = vunpack.c.h.b16 %v892
        %v1289 = vunpack.c.l.b16 %v893
        %v1290 = vunpack.c.h.b16 %v893
        %v1291 = vunpack.c.l.b16 %v894
        %v1292 = vunpack.c.h.b16 %v894
        %v1293 = vunpack.c.l.b16 %v895
        %v1294 = vunpack.c.h.b16 %v895
        %v1295 = vunpack.c.l.b16 %v896
        %v1296 = vunpack.c.h.b16 %v896
        %v1297 = vunpack.c.l.b16 %v897
        %v1298 = vunpack.c.h.b16 %v897
        %v1299 = vunpack.c.l.b16 %v898
        %v1300 = vunpack.c.h.b16 %v898
        %v1301 = vunpack.c.l.b16 %v899
        %v1302 = vunpack.c.h.b16 %v899
        %v1303 = vunpack.c.l.b16 %v900
        %v1304 = vunpack.c.h.b16 %v900
        %v1305 = vunpack.c.l.b16 %v901
        %v1306 = vunpack.c.h.b16 %v901
        %v1307 = vunpack.c.l.b16 %v902
        %v1308 = vunpack.c.h.b16 %v902
        %v1309 = vunpack.c.l.b16 %v903
        %v1310 = vunpack.c.h.b16 %v903
        %v1311 = vunpack.c.l.b16 %v904
        %v1312 = vunpack.c.h.b16 %v904
        %v1313 = vunpack.c.l.b16 %v905
        %v1314 = vunpack.c.h.b16 %v905
        %v1315 = vunpack.c.l.b16 %v906
        %v1316 = vunpack.c.h.b16 %v906
        %v1317 = vunpack.c.l.b16 %v907
        %v1318 = vunpack.c.h.b16 %v907
        %v1319 = vunpack.c.l.b16 %v908
        %v1320 = vunpack.c.h.b16 %v908
        %v1321 = vunpack.c.l.b16 %v909
        %v1322 = vunpack.c.h.b16 %v909
        %v1323 = vunpack.c.l.b16 %v910
        %v1324 = vunpack.c.h.b16 %v910
        %v1325 = vunpack.c.l.b16 %v911
        %v1326 = vunpack.c.h.b16 %v911
        %v1327 = vunpack.c.l.b16 %v912
        %v1328 = vunpack.c.h.b16 %v912
        %v1329 = vunpack.c.l.b16 %v913
        %v1330 = vunpack.c.h.b16 %v913
        %v1331 = vunpack.c.l.b16 %v914
        %v1332 = vunpack.c.h.b16 %v914
        %v1333 = vunpack.c.l.b16 %v915
        %v1334 = vunpack.c.h.b16 %v915
        %v1335 = vunpack.c.l.b16 %v916
        %v1336 = vunpack.c.h.b16 %v916
        %v1337 = vunpack.c.l.b16 %v917
        %v1338 = vunpack.c.h.b16 %v917
        %v1339 = vunpack.c.l.b16 %v918
        %v1340 = vunpack.c.h.b16 %v918
        %v1341 = vunpack.c.l.b16 %v919
        %v1342 = vunpack.c.h.b16 %v919
        %v1343 = vunpack.c.l.b16 %v920
        %v1344 = vunpack.c.h.b16 %v920
        %v1345 = vpack.c.b16 %v1091, %v1089
        %v1346 = vpack.c.b16 %v1092, %v1090
        %v1347 = vpack.c.b16 %v1095, %v1093
        %v1348 = vpack.c.b16 %v1096, %v1094
        %v1349 = vpack.c.b16 %v1099, %v1097
        %v1350 = vpack.c.b16 %v1100, %v1098
        %v1351 = vpack.c.b16 %v1103, %v1101
        %v1352 = vpack.c.b16 %v1104, %v1102
        %v1353 = vpack.c.b16 %v1107, %v1105
        %v1354 = vpack.c.b16 %v1108, %v1106
        %v1355 = vpack.c.b16 %v1111, %v1109
        %v1356 = vpack.c.b16 %v1112, %v1110
        %v1357 = vpack.c.b16 %v1115, %v1113
        %v1358 = vpack.c.b16 %v1116, %v1114
        %v1359 = vpack.c.b16 %v1119, %v1117
        %v1360 = vpack.c.b16 %v1120, %v1118
        %v1361 = vpack.c.b16 %v1123, %v1121
        %v1362 = vpack.c.b16 %v1124, %v1122
        %v1363 = vpack.c.b16 %v1127, %v1125
        %v1364 = vpack.c.b16 %v1128, %v1126
        %v1365 = vpack.c.b16 %v1131, %v1129
        %v1366 = vpack.c.b16 %v1132, %v1130
        %v1367 = vpack.c.b16 %v1135, %v1133
        %v1368 = vpack.c.b16 %v1136, %v1134
        %v1369 = vpack.c.b16 %v1139, %v1137
        %v1370 = vpack.c.b16 %v1140, %v1138
        %v1371 = vpack.c.b16 %v1143, %v1141
        %v1372 = vpack.c.b16 %v1144, %v1142
        %v1373 = vpack.c.b16 %v1147, %v1145
        %v1374 = vpack.c.b16 %v1148, %v1146
        %v1375 = vpack.c.b16 %v1151, %v1149
        %v1376 = vpack.c.b16 %v1152, %v1150
        %v1377 = vpack.c.b16 %v1155, %v1153
        %v1378 = vpack.c.b16 %v1156, %v1154
        %v1379 = vpack.c.b16 %v1159, %v1157
        %v1380 = vpack.c.b16 %v1160, %v1158
        %v1381 = vpack.c.b16 %v1163, %v1161
        %v1382 = vpack.c.b16 %v1164, %v1162
        %v1383 = vpack.c.b16 %v1167, %v1165
        %v1384 = vpack.c.b16 %v1168, %v1166
        %v1385 = vpack.c.b16 %v1171, %v1169
        %v1386 = vpack.c.b16 %v1172, %v1170
        %v1387 = vpack.c.b16 %v1175, %v1173
        %v1388 = vpack.c.b16 %v1176, %v1174
        %v1389 = vpack.c.b16 %v1179, %v1177
        %v1390 = vpack.c.b16 %v1180, %v1178
        %v1391 = vpack.c.b16 %v1183, %v1181
        %v1392 = vpack.c.b16 %v1184, %v1182
        %v1393 = vpack.c.b16 %v1187, %v1185
        %v1394 = vpack.c.b16 %v1188, %v1186
        %v1395 = vpack.c.b16 %v1191, %v1189
        %v1396 = vpack.c.b16 %v1192, %v1190
        %v1397 = vpack.c.b16 %v1195, %v1193
        %v1398 = vpack.c.b16 %v1196, %v1194
        %v1399 = vpack.c.b16 %v1199, %v1197
        %v1400 = vpack.c.b16 %v1200, %v1198
        %v1401 = vpack.c.b16 %v1203, %v1201
        %v1402 = vpack.c.b16 %v1204, %v1202
        %v1403 = vpack.c.b16 %v1207, %v1205
        %v1404 = vpack.c.b16 %v1208, %v1206
        %v1405 = vpack.c.b16 %v1211, %v1209
        %v1406 = vpack.c.b16 %v1212, %v1210
        %v1407 = vpack.c.b16 %v1215, %v1213
        %v1408 = vpack.c.b16 %v1216, %v1214
        %v1409 = vpack.c.b16 %v1219, %v1217
        %v1410 = vpack.c.b16 %v1220, %v1218
        %v1411 = vpack.c.b16 %v1223, %v1221
        %v1412 = vpack.c.b16 %v1224, %v1222
        %v1413 = vpack.c.b16 %v1227, %v1225
        %v1414 = vpack.c.b16 %v1228, %v1226
        %v1415 = vpack.c.b16 %v1231, %v1229
        %v1416 = vpack.c.b16 %v1232, %v1230
        %v1417 = vpack.c.b16 %v1235, %v1233
        %v1418 = vpack.c.b16 %v1236, %v1234
        %v1419 = vpack.c.b16 %v1239, %v1237
        %v1420 = vpack.c.b16 %v1240, %v1238
        %v1421 = vpack.c.b16 %v1243, %v1241
        %v1422 = vpack.c.b16 %v1244, %v1242
        %v1423 = vpack.c.b16 %v1247, %v1245
        %v1424 = vpack.c.b16 %v1248, %v1246
        %v1425 = vpack.c.b16 %v1251, %v1249
        %v1426 = vpack.c.b16 %v1252, %v1250
        %v1427 = vpack.c.b16 %v1255, %v1253
        %v1428 = vpack.c.b16 %v1256, %v1254
        %v1429 = vpack.c.b16 %v1259, %v1257
        %v1430 = vpack.c.b16 %v1260, %v1258
        %v1431 = vpack.c.b16 %v1263, %v1261
        %v1432 = vpack.c.b16 %v1264, %v1262
        %v1433 = vpack.c.b16 %v1267, %v1265
        %v1434 = vpack.c.b16 %v1268, %v1266
        %v1435 = vpack.c.b16 %v1271, %v1269
        %v1436 = vpack.c.b16 %v1272, %v1270
        %v1437 = vpack.c.b16 %v1275, %v1273
        %v1438 = vpack.c.b16 %v1276, %v1274
        %v1439 = vpack.c.b16 %v1279, %v1277
        %v1440 = vpack.c.b16 %v1280, %v1278
        %v1441 = vpack.c.b16 %v1283, %v1281
        %v1442 = vpack.c.b16 %v1284, %v1282
        %v1443 = vpack.c.b16 %v1287, %v1285
        %v1444 = vpack.c.b16 %v1288, %v1286
        %v1445 = vpack.c.b16 %v1291, %v1289
        %v1446 = vpack.c.b16 %v1292, %v1290
        %v1447 = vpack.c.b16 %v1295, %v1293
        %v1448 = vpack.c.b16 %v1296, %v1294
        %v1449 = vpack.c.b16 %v1299, %v1297
        %v1450 = vpack.c.b16 %v1300, %v1298
        %v1451 = vpack.c.b16 %v1303, %v1301
        %v1452 = vpack.c.b16 %v1304, %v1302
        %v1453 = vpack.c.b16 %v1307, %v1305
        %v1454 = vpack.c.b16 %v1308, %v1306
        %v1455 = vpack.c.b16 %v1311, %v1309
        %v1456 = vpack.c.b16 %v1312, %v1310
        %v1457 = vpack.c.b16 %v1315, %v1313
        %v1458 = vpack.c.b16 %v1316, %v1314
        %v1459 = vpack.c.b16 %v1319, %v1317
        %v1460 = vpack.c.b16 %v1320, %v1318
        %v1461 = vpack.c.b16 %v1323, %v1321
        %v1462 = vpack.c.b16 %v1324, %v1322
        %v1463 = vpack.c.b16 %v1327, %v1325
        %v1464 = vpack.c.b16 %v1328, %v1326
        %v1465 = vpack.c.b16 %v1331, %v1329
        %v1466 = vpack.c.b16 %v1332, %v1330
        %v1467 = vpack.c.b16 %v1335, %v1333
        %v1468 = vpack.c.b16 %v1336, %v1334
        %v1469 = vpack.c.b16 %v1339, %v1337
        %v1470 = vpack.c.b16 %v1340, %v1338
        %v1471 = vpack.c.b16 %v1343, %v1341
        %v1472 = vpack.c.b16 %v1344, %v1342
        %1601 = vmatprep.subr.bf16.mxu0 %v1346
        %1602 = vmatpush1.bf16.msra.mxu0 %v1345
        %1603 = vmatprep.subr.bf16.mxu0 %v1348
        %1604 = vmatpush1.bf16.msra.mxu0 %v1347
        %1605 = vmatprep.subr.bf16.mxu0 %v1350
        %1606 = vmatpush1.bf16.msra.mxu0 %v1349
        %1607 = vmatprep.subr.bf16.mxu0 %v1352
        %1608 = vmatpush1.bf16.msra.mxu0 %v1351
        %1609 = vmatprep.subr.bf16.mxu0 %v1354
        %1610 = vmatpush1.bf16.msra.mxu0 %v1353
        %1611 = vmatprep.subr.bf16.mxu0 %v1356
        %1612 = vmatpush1.bf16.msra.mxu0 %v1355
        %1613 = vmatprep.subr.bf16.mxu0 %v1358
        %1614 = vmatpush1.bf16.msra.mxu0 %v1357
        %1615 = vmatprep.subr.bf16.mxu0 %v1360
        %1616 = vmatpush1.bf16.msra.mxu0 %v1359
        %1617 = vmatprep.subr.bf16.mxu0 %v1362
        %1618 = vmatpush1.bf16.msra.mxu0 %v1361
        %1619 = vmatprep.subr.bf16.mxu0 %v1364
        %1620 = vmatpush1.bf16.msra.mxu0 %v1363
        %1621 = vmatprep.subr.bf16.mxu0 %v1366
        %1622 = vmatpush1.bf16.msra.mxu0 %v1365
        %1623 = vmatprep.subr.bf16.mxu0 %v1368
        %1624 = vmatpush1.bf16.msra.mxu0 %v1367
        %1625 = vmatprep.subr.bf16.mxu0 %v1370
        %1626 = vmatpush1.bf16.msra.mxu0 %v1369
        %1627 = vmatprep.subr.bf16.mxu0 %v1372
        %1628 = vmatpush1.bf16.msra.mxu0 %v1371
        %1629 = vmatprep.subr.bf16.mxu0 %v1374
        %1630 = vmatpush1.bf16.msra.mxu0 %v1373
        %1631 = vmatprep.subr.bf16.mxu0 %v1376
        %1632 = vmatpush1.bf16.msra.mxu0 %v1375
        %1633 = vmatprep.mubr.bf16.mxu0 %v946
        %1634 = vmatmul.mubr.bf16.gmra.mrb[0].mxu0 %v945
        %v1635 = vpop.f32.mrb[0].mxu0
        %v1636 = vadd.f32 %v926, %v1635
        %v1637 = vpop.f32.mrb[0].mxu0
        %v1638 = vadd.f32 %v930, %v1637
        %v1639 = vpop.f32.mrb[0].mxu0
        %v1640 = vpop.f32.mrb[0].mxu0
        %1641 = vdwg.mxu0
        %1642 = vmatprep.subr.bf16.mxu0 %v1378
        %1643 = vmatpush1.bf16.msra.mxu0 %v1377
        %1644 = vmatprep.subr.bf16.mxu0 %v1380
        %1645 = vmatpush1.bf16.msra.mxu0 %v1379
        %1646 = vmatprep.subr.bf16.mxu0 %v1382
        %1647 = vmatpush1.bf16.msra.mxu0 %v1381
        %1648 = vmatprep.subr.bf16.mxu0 %v1384
        %1649 = vmatpush1.bf16.msra.mxu0 %v1383
        %1650 = vmatprep.subr.bf16.mxu0 %v1386
        %1651 = vmatpush1.bf16.msra.mxu0 %v1385
        %1652 = vmatprep.subr.bf16.mxu0 %v1388
        %1653 = vmatpush1.bf16.msra.mxu0 %v1387
        %1654 = vmatprep.subr.bf16.mxu0 %v1390
        %1655 = vmatpush1.bf16.msra.mxu0 %v1389
        %1656 = vmatprep.subr.bf16.mxu0 %v1392
        %1657 = vmatpush1.bf16.msra.mxu0 %v1391
        %1658 = vmatprep.subr.bf16.mxu0 %v1394
        %1659 = vmatpush1.bf16.msra.mxu0 %v1393
        %1660 = vmatprep.subr.bf16.mxu0 %v1396
        %1661 = vmatpush1.bf16.msra.mxu0 %v1395
        %1662 = vmatprep.subr.bf16.mxu0 %v1398
        %1663 = vmatpush1.bf16.msra.mxu0 %v1397
        %1664 = vmatprep.subr.bf16.mxu0 %v1400
        %1665 = vmatpush1.bf16.msra.mxu0 %v1399
        %1666 = vmatprep.subr.bf16.mxu0 %v1402
        %1667 = vmatpush1.bf16.msra.mxu0 %v1401
        %1668 = vmatprep.subr.bf16.mxu0 %v1404
        %1669 = vmatpush1.bf16.msra.mxu0 %v1403
        %1670 = vmatprep.subr.bf16.mxu0 %v1406
        %1671 = vmatpush1.bf16.msra.mxu0 %v1405
        %1672 = vmatprep.subr.bf16.mxu0 %v1408
        %1673 = vmatpush1.bf16.msra.mxu0 %v1407
        %1674 = vmatprep.mubr.bf16.mxu0 %v948
        %1675 = vmatmul.mubr.bf16.gmra.mrb[0].mxu0 %v947
        %v1676 = vpop.f32.mrb[0].mxu0
        %v1677 = vadd.f32 %v1636, %v1676
        %v1678 = vpop.f32.mrb[0].mxu0
        %v1679 = vadd.f32 %v1638, %v1678
        %v1680 = vpop.f32.mrb[0].mxu0
        %v1681 = vpop.f32.mrb[0].mxu0
        %1682 = vdwg.mxu0
        %1683 = vmatprep.subr.bf16.mxu0 %v1410
        %1684 = vmatpush1.bf16.msra.mxu0 %v1409
        %1685 = vmatprep.subr.bf16.mxu0 %v1412
        %1686 = vmatpush1.bf16.msra.mxu0 %v1411
        %1687 = vmatprep.subr.bf16.mxu0 %v1414
        %1688 = vmatpush1.bf16.msra.mxu0 %v1413
        %1689 = vmatprep.subr.bf16.mxu0 %v1416
        %1690 = vmatpush1.bf16.msra.mxu0 %v1415
        %1691 = vmatprep.subr.bf16.mxu0 %v1418
        %1692 = vmatpush1.bf16.msra.mxu0 %v1417
        %1693 = vmatprep.subr.bf16.mxu0 %v1420
        %1694 = vmatpush1.bf16.msra.mxu0 %v1419
        %1695 = vmatprep.subr.bf16.mxu0 %v1422
        %1696 = vmatpush1.bf16.msra.mxu0 %v1421
        %1697 = vmatprep.subr.bf16.mxu0 %v1424
        %1698 = vmatpush1.bf16.msra.mxu0 %v1423
        %1699 = vmatprep.subr.bf16.mxu0 %v1426
        %1700 = vmatpush1.bf16.msra.mxu0 %v1425
        %1701 = vmatprep.subr.bf16.mxu0 %v1428
        %1702 = vmatpush1.bf16.msra.mxu0 %v1427
        %1703 = vmatprep.subr.bf16.mxu0 %v1430
        %1704 = vmatpush1.bf16.msra.mxu0 %v1429
        %1705 = vmatprep.subr.bf16.mxu0 %v1432
        %1706 = vmatpush1.bf16.msra.mxu0 %v1431
        %1707 = vmatprep.subr.bf16.mxu0 %v1434
        %1708 = vmatpush1.bf16.msra.mxu0 %v1433
        %1709 = vmatprep.subr.bf16.mxu0 %v1436
        %1710 = vmatpush1.bf16.msra.mxu0 %v1435
        %1711 = vmatprep.subr.bf16.mxu0 %v1438
        %1712 = vmatpush1.bf16.msra.mxu0 %v1437
        %1713 = vmatprep.subr.bf16.mxu0 %v1440
        %1714 = vmatpush1.bf16.msra.mxu0 %v1439
        %1715 = vmatprep.mubr.bf16.mxu0 %v950
        %1716 = vmatmul.mubr.bf16.gmra.mrb[0].mxu0 %v949
        %v1717 = vpop.f32.mrb[0].mxu0
        %v1718 = vadd.f32 %v1677, %v1717
        %v1719 = vpop.f32.mrb[0].mxu0
        %v1720 = vadd.f32 %v1679, %v1719
        %v1721 = vpop.f32.mrb[0].mxu0
        %v1722 = vpop.f32.mrb[0].mxu0
        %1723 = vdwg.mxu0
        %1724 = vmatprep.subr.bf16.mxu0 %v1442
        %1725 = vmatpush1.bf16.msra.mxu0 %v1441
        %1726 = vmatprep.subr.bf16.mxu0 %v1444
        %1727 = vmatpush1.bf16.msra.mxu0 %v1443
        %1728 = vmatprep.subr.bf16.mxu0 %v1446
        %1729 = vmatpush1.bf16.msra.mxu0 %v1445
        %1730 = vmatprep.subr.bf16.mxu0 %v1448
        %1731 = vmatpush1.bf16.msra.mxu0 %v1447
        %1732 = vmatprep.subr.bf16.mxu0 %v1450
        %1733 = vmatpush1.bf16.msra.mxu0 %v1449
        %1734 = vmatprep.subr.bf16.mxu0 %v1452
        %1735 = vmatpush1.bf16.msra.mxu0 %v1451
        %1736 = vmatprep.subr.bf16.mxu0 %v1454
        %1737 = vmatpush1.bf16.msra.mxu0 %v1453
        %1738 = vmatprep.subr.bf16.mxu0 %v1456
        %1739 = vmatpush1.bf16.msra.mxu0 %v1455
        %1740 = vmatprep.subr.bf16.mxu0 %v1458
        %1741 = vmatpush1.bf16.msra.mxu0 %v1457
        %1742 = vmatprep.subr.bf16.mxu0 %v1460
        %1743 = vmatpush1.bf16.msra.mxu0 %v1459
        %1744 = vmatprep.subr.bf16.mxu0 %v1462
        %1745 = vmatpush1.bf16.msra.mxu0 %v1461
        %1746 = vmatprep.subr.bf16.mxu0 %v1464
        %1747 = vmatpush1.bf16.msra.mxu0 %v1463
        %1748 = vmatprep.subr.bf16.mxu0 %v1466
        %1749 = vmatpush1.bf16.msra.mxu0 %v1465
        %1750 = vmatprep.subr.bf16.mxu0 %v1468
        %1751 = vmatpush1.bf16.msra.mxu0 %v1467
        %1752 = vmatprep.subr.bf16.mxu0 %v1470
        %1753 = vmatpush1.bf16.msra.mxu0 %v1469
        %1754 = vmatprep.subr.bf16.mxu0 %v1472
        %1755 = vmatpush1.bf16.msra.mxu0 %v1471
        %1756 = vmatprep.mubr.bf16.mxu0 %v952
        %1757 = vmatmul.mubr.bf16.gmra.mrb[0].mxu0 %v951
        %v1758 = vpop.f32.mrb[0].mxu0
        %v1759 = vadd.f32 %v1718, %v1758
        %v1760 = vpop.f32.mrb[0].mxu0
        %v1761 = vadd.f32 %v1720, %v1760
        %v1762 = vpop.f32.mrb[0].mxu0
        %v1763 = vpop.f32.mrb[0].mxu0
        %1764 = vdwg.mxu0
        %v1765 = vmax.f32 %v1759, 0.0
        %v1766 = vmax.f32 %v1761, 0.0
        %v1767 = vld [vmem:[#allocation3] sm:$0xff]
        %v1768 = vld [vmem:[%s361] sm:$0x3]
        %v1770 = vlaneseq
        %v1771 = vshrl.u32 %v1770, 7
        %v1772 = vsub.s32 0, %v1771
        %v1773 = vrot.slane %v1768, %v1772
        %v1774 = vlaneseq
        %v1775 = vshrl.u32 %v1774, 7
        %v1776 = vsub.s32 1, %v1775
        %v1777 = vrot.slane %v1768, %v1776
        %v1780 = vmul.f32 %v1765, %v1773
        %v1781 = vmul.f32 %v1766, %v1777
        %v1782 = vadd.f32 %v1780, %v1781
        %1783 = vadd.xlane.f32.xlu0 %v1782
        %v1784 = vpop.xlane.xlu0 %1783
        %v1785 = vadd.f32 %v1767, %v1784
        %vm1786 = vcmask 7168
        %1787 = vst.msk [vmem:[#allocation3] sm:$0xff] %vm1786, %v1785
        %p1788 = scmp.eq.s32.totalorder %s28, 3
        // Predicated region
        $region77: #{tpu_custom_call.1} parent=47 // pred_check
          %p1789 = pneg %p1788
        $region78: #{tpu_custom_call.1} parent=47 // pred_check_branch
          %1791 = sbr.rel (%p1789) target = $region80
        $region79: #{tpu_custom_call.1} parent=47 // pred_region
          %v1792 = vld [vmem:[#allocation3] sm:$0xff]
          %v1793 = vld [vmem:[#allocation4] sm:$0x1]
          %v1795 = vlaneseq
          %v1796 = vshrl.u32 %v1795, 7
          %v1797 = vsub.s32 0, %v1796
          %v1798 = vrot.slane %v1793, %v1797
          %v1800 = vadd.f32 %v1792, %v1798
          %v1801 = vxor.u32 %v1800, 2147483648
          %v1802 = vmul.f32 %v1801, 1.442695
          %v1803 = vpow.pop %v1802
          %v1804 = vadd.f32 %v1803, 1.0
          %v1805 = vrcp.pop %v1804
          %v1806 = vmul.f32 1.0, %v1805
          %1807 = vst.msk [vmem:[%s7] sm:$0xff] %vm1786, %v1806
        $region80: #{tpu_custom_call.1} parent=47 // pred_fallthru
          _
        // Predicated region
        $region81: #{tpu_custom_call.1} parent=47 // pred_check
          %p1808 = pneg %p203
        $region82: #{tpu_custom_call.1} parent=47 // pred_check_branch
          %1810 = sbr.rel (%p1808) target = $region84
        $region83: #{tpu_custom_call.1} parent=47 // pred_region
          _
        $region84: #{tpu_custom_call.1} parent=47 // pred_fallthru
          _
        // Predicated region
        $region85: #{tpu_custom_call.1} parent=47 // pred_check
          %p1811 = pneg %p203
        $region86: #{tpu_custom_call.1} parent=47 // pred_check_branch
          %1813 = sbr.rel (%p1811) target = $region88
        $region87: #{tpu_custom_call.1} parent=47 // pred_region
          _
        $region88: #{tpu_custom_call.1} parent=47 // pred_fallthru
          _
      $region48: #{tpu_custom_call.1} parent=5 // pred_fallthru
        _
      %p1814 = scmp.le.s32.totalorder 2, %s23
      // Predicated region
      $region89: #{tpu_custom_call.1} parent=5 // pred_check
        %p1815 = pneg %p1814
      $region90: #{tpu_custom_call.1} parent=5 // pred_check_branch
        %1817 = sbr.rel (%p1815) target = $region92
      $region91: #{tpu_custom_call.1} parent=5 // pred_region
        %s1818 = ssub.s32 %s23, 2
      $region92: #{tpu_custom_call.1} parent=5 // pred_fallthru
        _
    $region6: #{tpu_custom_call.1} parent=1 // loop_footer
      %s27 = sadd.s32 1, %s23
    $region7: #{tpu_custom_call.1} parent=1 // loop_footer_branch
      %22 = sbr.rel target = $region3
    $region8: #{tpu_custom_call.1} parent=1 // loop_exit
      _
    %1819 = vsyncpa [#allocation6], 1
    %s1820 = scalar_lea.sflag [#allocation6], 1
    %1821 = vsyncpa %s1820, 1
    %1822 = vsyncpa [#allocation8], 1
    %1823 = vsyncpa [#allocation11], 1
    %s1824 = scalar_lea.sflag [#allocation11], 1
    %1825 = vsyncpa %s1824, 1
    %1826 = vsyncpa [#allocation14], 1
    %s1827 = scalar_lea.sflag [#allocation14], 1
    %1828 = vsyncpa %s1827, 1

</llo_original>
